<compile_context>
chip_gen: v5e
topology: v5e:2x2
jax: 0.10.0
libtpu: 0.0.40
codegen_flags: <defaults>
</compile_context>

<pallas_src>
import functools

import jax
import jax.numpy as jnp
from jax import lax
from jax.experimental import pallas as pl
from jax.experimental.pallas import tpu as pltpu

EPS = 1e-5


def _layernorm(x, scale, shift):
    # Matches the PyTorch module's custom LayerNorm: torch.Tensor.var default is
    # UNBIASED (divide by E-1).
    e = x.shape[-1]
    mean = jnp.mean(x, axis=-1, keepdims=True)
    var = jnp.sum((x - mean) ** 2, axis=-1, keepdims=True) * (1.0 / (e - 1))
    return scale * ((x - mean) / jnp.sqrt(var + EPS)) + shift


def _gelu_tanh(x):
    c = jnp.sqrt(2.0 / jnp.pi).astype(x.dtype)
    return 0.5 * x * (1.0 + jnp.tanh(c * (x + 0.044715 * x * x * x)))


def _transformer_block_kernel(num_heads,
                              x_ref, ln1_s_ref, ln1_b_ref, ln2_s_ref, ln2_b_ref,
                              wqkv_ref, wo_ref, bo_ref,
                              w1_ref, b1_ref, w2_ref, b2_ref,
                              o_ref, ctx_sc):
    Bb, T, E = x_ref.shape
    NH = num_heads
    hd = E // NH
    cdt = wqkv_ref.dtype                       # MXU operand dtype (bf16 or f32)
    inv_sqrt_hd = jnp.float32(1.0 / float(hd) ** 0.5)

    # ---- hoist grid-invariant parameters once (all f32) ----
    ln1_s = ln1_s_ref[...]
    ln1_b = ln1_b_ref[...]
    ln2_s = ln2_s_ref[...]
    ln2_b = ln2_b_ref[...]
    bo = bo_ref[...]
    b1 = b1_ref[...]
    b2 = b2_ref[...]

    # ---- additive causal mask built in-kernel (no HBM traffic / mask input) ----
    # -1e30 (finite) is safe: the diagonal is never masked, so each softmax row has
    # at least one zero-offset entry.  NOTE: if padding masks are ever added, a
    # fully-masked row would silently become uniform instead of NaN.
    rows = lax.broadcasted_iota(jnp.int32, (T, T), 0)
    cols = lax.broadcasted_iota(jnp.int32, (T, T), 1)
    mask_add = jnp.where(cols > rows, jnp.float32(-1e30), jnp.float32(0.0))
    mask_add = jnp.broadcast_to(mask_add, (Bb, T, T))   # hoisted out of the head loop

    # Flatten batch*time so every projection is a single wide (M=Bb*T) MXU matmul.
    x2d = x_ref[...].reshape(Bb * T, E)

    # ---- LayerNorm 1 (f32) ----
    xn = _layernorm(x2d, ln1_s, ln1_b)

    # ---- fused QKV projection: ONE (Bb*T, E) x (E, 3E) matmul, f32 accumulation ----
    qkv = jnp.dot(xn.astype(cdt), wqkv_ref[...],
                  preferred_element_type=jnp.float32)            # (Bb*T, 3E) f32
    q = (qkv[:, :E] * inv_sqrt_hd).astype(cdt).reshape(Bb, T, E)  # fold 1/sqrt(hd) into q
    k = qkv[:, E:2 * E].astype(cdt).reshape(Bb, T, E)
    v = qkv[:, 2 * E:].astype(cdt).reshape(Bb, T, E)

    # ---- attention: heads unrolled at trace time, matmuls batched over Bb ----
    # (per-head score/PV contractions over hd are inherent to attention; the head
    #  loop only takes static lane slices -- no per-head projection matmuls remain)
    for h in range(NH):
        sl = slice(h * hd, (h + 1) * hd)
        s = jnp.einsum('bqd,bkd->bqk', q[:, :, sl], k[:, :, sl],
                       preferred_element_type=jnp.float32)       # (Bb, T, T) f32
        s = s + mask_add
        m = jnp.max(s, axis=-1, keepdims=True)
        p = jnp.exp(s - m)
        p = p / jnp.sum(p, axis=-1, keepdims=True)               # exact softmax (f32)
        # dropout on attn_weights == identity (eval mode)
        ctx_h = jnp.einsum('bqk,bkd->bqd', p.astype(cdt), v[:, :, sl],
                           preferred_element_type=jnp.float32)   # (Bb, T, hd) f32
        # assemble per-head context into a VMEM scratch via static lane-slice stores
        ctx_sc[:, sl] = ctx_h.reshape(Bb * T, hd)

    # ---- output projection: ONE (Bb*T, E) x (E, E) matmul; head reduction in MXU ----
    attn = jnp.dot(ctx_sc[...].astype(cdt), wo_ref[...],
                   preferred_element_type=jnp.float32) + bo
    x1 = attn + x2d                                              # dropout == identity

    # ---- LayerNorm 2 + FeedForward (GELU tanh); elementwise f32, MXU operands cdt ----
    xn2 = _layernorm(x1, ln2_s, ln2_b)
    h1 = jnp.dot(xn2.astype(cdt), w1_ref[...],
                 preferred_element_type=jnp.float32) + b1
    h1 = _gelu_tanh(h1)
    y = jnp.dot(h1.astype(cdt), w2_ref[...],
                preferred_element_type=jnp.float32) + b2
    o_ref[...] = (y + x1).reshape(Bb, T, E).astype(o_ref.dtype)  # dropout == identity


def _vmem_limit_bytes(block_b, T, E, mxu_dtype):
    """Scoped-VMEM request from the actual per-step footprint, clamped per chip gen."""
    wdt = jnp.dtype(mxu_dtype).itemsize
    f32 = 4
    H4 = 4 * E
    # weights (Wqkv + Wo + W1 + W2) in MXU dtype, small f32 params
    weights = 12 * E * E * wdt + (7 * E + H4) * f32
    # pipelined x / out blocks
    io_blocks = 2 * block_b * T * E * f32
    # live activations (qkv, residuals, LN temporaries, ctx scratch, FFN hidden, a few
    # score buffers) -- generous upper bound on simultaneously-live f32 data
    acts = block_b * T * (16 * E + 3 * H4) * f32 + 6 * block_b * T * T * f32
    # default pipelining double-buffers weights and io blocks (weights are NOT
    # single-buffered here -- see TODO about pl.Buffered(1)), so count them twice once.
    need = 2 * (weights + io_blocks) + acts
    try:
        phys = getattr(pltpu.get_tpu_info(), "vmem_capacity_bytes", None) or (64 << 20)
    except Exception:  # pragma: no cover - conservative fallback (assume v7x per-TC)
        phys = 64 << 20
    cap = (3 * phys) // 4          # leave headroom for compiler internal scratch
    return int(min(max(need + need // 2, 32 << 20), cap))


def transformer_block(x, params, num_heads, *, block_b=None, mxu_dtype=jnp.bfloat16):
    B, T, E = x.shape
    assert E % num_heads == 0
    H4 = 4 * E
    (ln1_s, ln1_b, ln2_s, ln2_b,
     wq, wk, wv, wo, bo, w1, b1, w2, b2) = params

    if block_b is None:
        # At small shapes one grid step over the whole batch amortizes all pipeline
        # overhead.  For large B on v7x pass block_b = B // (2*n) so the grid stays a
        # multiple of 2 and both TensorCores get work under "parallel" semantics.
        block_b = B
    assert B % block_b == 0
    grid_b = B // block_b

    f32 = jnp.float32
    ln1_s = jnp.asarray(ln1_s, f32).reshape(1, E)
    ln1_b = jnp.asarray(ln1_b, f32).reshape(1, E)
    ln2_s = jnp.asarray(ln2_s, f32).reshape(1, E)
    ln2_b = jnp.asarray(ln2_b, f32).reshape(1, E)
    bo = jnp.asarray(bo, f32).reshape(1, E)
    b1 = jnp.asarray(b1, f32).reshape(1, H4)
    b2 = jnp.asarray(b2, f32).reshape(1, E)

    # MXU operands in bf16 (f32 accumulation in-kernel).  Fold Wq|Wk|Wv into one
    # (E, 3E) matrix so the QKV projection is a single wide matmul; per-head columns
    # inside each E-wide section already match torch's view(B,T,NH,hd) split.
    wqkv = jnp.concatenate([wq, wk, wv], axis=1).astype(mxu_dtype)   # (E, 3E)
    wo_c = jnp.asarray(wo, mxu_dtype)                                # (E, E)
    w1_c = jnp.asarray(w1, mxu_dtype)                                # (E, 4E)
    w2_c = jnp.asarray(w2, mxu_dtype)                                # (4E, E)

    def full(shape):
        return pl.BlockSpec(shape, lambda b, _n=len(shape): (0,) * _n)

    kernel = functools.partial(_transformer_block_kernel, num_heads)

    return pl.pallas_call(
        kernel,
        out_shape=jax.ShapeDtypeStruct((B, T, E), x.dtype),
        grid=(grid_b,),
        in_specs=[
            pl.BlockSpec((block_b, T, E), lambda b: (b, 0, 0)),  # x block
            full((1, E)), full((1, E)),                          # ln1 scale / shift
            full((1, E)), full((1, E)),                          # ln2 scale / shift
            full((E, 3 * E)),                                    # fused Wqkv
            full((E, E)),                                        # Wo
            full((1, E)),                                        # bo
            full((E, H4)), full((1, H4)),                        # W1, b1
            full((H4, E)), full((1, E)),                         # W2, b2
        ],
        out_specs=pl.BlockSpec((block_b, T, E), lambda b: (b, 0, 0)),
        scratch_shapes=[pltpu.VMEM((block_b * T, E), jnp.float32)],  # per-head ctx slab
        compiler_params=pltpu.CompilerParams(
            dimension_semantics=("parallel",),
            vmem_limit_bytes=_vmem_limit_bytes(block_b, T, E, mxu_dtype)),
    )(x, ln1_s, ln1_b, ln2_s, ln2_b, wqkv, wo_c, bo, w1_c, b1, w2_c, b2)


# ----------------------- pure-JAX reference (ground truth) -----------------------
def ref_transformer_block(x, params, num_heads):
    (ln1_s, ln1_b, ln2_s, ln2_b,
     wq, wk, wv, wo, bo, w1, b1, w2, b2) = params
    B, T, E = x.shape
    hd = E // num_heads

    def ln(z, s, b):
        mean = jnp.mean(z, axis=-1, keepdims=True)
        var = jnp.sum((z - mean) ** 2, axis=-1, keepdims=True) / (E - 1)
        return s * ((z - mean) / jnp.sqrt(var + EPS)) + b

    with jax.default_matmul_precision("highest"):
        xn = ln(x, ln1_s, ln1_b)
        q = (xn @ wq).reshape(B, T, num_heads, hd).transpose(0, 2, 1, 3)
        k = (xn @ wk).reshape(B, T, num_heads, hd).transpose(0, 2, 1, 3)
        v = (xn @ wv).reshape(B, T, num_heads, hd).transpose(0, 2, 1, 3)
        s = jnp.einsum('bhqd,bhkd->bhqk', q, k)
        mask = jnp.triu(jnp.ones((T, T), bool), k=1)
        s = jnp.where(mask, -jnp.inf, s) / jnp.sqrt(jnp.float32(hd))
        p = jax.nn.softmax(s, axis=-1)
        ctx = jnp.einsum('bhqk,bhkd->bhqd', p, v).transpose(0, 2, 1, 3).reshape(B, T, E)
        x1 = ctx @ wo + bo + x
        xn2 = ln(x1, ln2_s, ln2_b)
        h1 = xn2 @ w1 + b1
        h1 = 0.5 * h1 * (1.0 + jnp.tanh(jnp.sqrt(2.0 / jnp.pi)
                                        * (h1 + 0.044715 * h1 ** 3)))
        return h1 @ w2 + b2 + x1


if __name__ == "__main__":
    # cfg: vocab_size=100, context_length=8, emb_dim=32, num_heads=4,
    #      n_layers=1, drop_rate=0.1 (identity in eval), qkv_bias=False
    B, T, E, NH = 2, 8, 32, 4
    H4 = 4 * E

    key = jax.random.PRNGKey(0)
    ks = jax.random.split(key, 16)
    x = jax.random.normal(ks[0], (B, T, E), jnp.float32)

    ln1_s = 1.0 + 0.1 * jax.random.normal(ks[1], (E,), jnp.float32)
    ln1_b = 0.1 * jax.random.normal(ks[2], (E,), jnp.float32)
    ln2_s = 1.0 + 0.1 * jax.random.normal(ks[3], (E,), jnp.float32)
    ln2_b = 0.1 * jax.random.normal(ks[4], (E,), jnp.float32)
    wq = 0.05 * jax.random.normal(ks[5], (E, E), jnp.float32)
    wk = 0.05 * jax.random.normal(ks[6], (E, E), jnp.float32)
    wv = 0.05 * jax.random.normal(ks[7], (E, E), jnp.float32)
    wo = 0.05 * jax.random.normal(ks[8], (E, E), jnp.float32)
    bo = 0.02 * jax.random.normal(ks[9], (E,), jnp.float32)
    w1 = 0.05 * jax.random.normal(ks[10], (E, H4), jnp.float32)
    b1 = 0.02 * jax.random.normal(ks[11], (H4,), jnp.float32)
    w2 = 0.05 * jax.random.normal(ks[12], (H4, E), jnp.float32)
    b2 = 0.02 * jax.random.normal(ks[13], (E,), jnp.float32)

    params = (ln1_s, ln1_b, ln2_s, ln2_b, wq, wk, wv, wo, bo, w1, b1, w2, b2)

    # default (performance) path: bf16 MXU operands, f32 accumulation
    out_bf16 = jax.block_until_ready(transformer_block(x, params, NH))
    # exact path: f32 MXU operands (used for the tight correctness check)
    out_f32 = jax.block_until_ready(
        transformer_block(x, params, NH, mxu_dtype=jnp.float32))

    ref = ref_transformer_block(x, params, NH)

    assert out_bf16.shape == (B, T, E)
    assert jnp.allclose(out_f32, ref, atol=2e-3, rtol=2e-3), \
        "f32 kernel mismatch vs reference"
    # bf16 MXU operands with f32 accumulation: gap vs. the f32 reference is the
    # expected bf16 operand rounding, not an algorithmic difference.
    assert jnp.allclose(out_bf16, ref, atol=2e-2, rtol=2e-2), \
        "bf16 kernel mismatch vs reference"

    print("KERNEL_OK")
</pallas_src>

<mosaic_0001>
module attributes {stable_mosaic.version = 11 : i64} {
  func.func @_transformer_block_kernel(%arg0: i32, %arg1: memref<2x8x32xf32, #tpu.memory_space<vmem>>, %arg2: memref<1x32xf32, #tpu.memory_space<vmem>>, %arg3: memref<1x32xf32, #tpu.memory_space<vmem>>, %arg4: memref<1x32xf32, #tpu.memory_space<vmem>>, %arg5: memref<1x32xf32, #tpu.memory_space<vmem>>, %arg6: memref<32x96xbf16, #tpu.memory_space<vmem>>, %arg7: memref<32x32xbf16, #tpu.memory_space<vmem>>, %arg8: memref<1x32xf32, #tpu.memory_space<vmem>>, %arg9: memref<32x128xbf16, #tpu.memory_space<vmem>>, %arg10: memref<1x128xf32, #tpu.memory_space<vmem>>, %arg11: memref<128x32xbf16, #tpu.memory_space<vmem>>, %arg12: memref<1x32xf32, #tpu.memory_space<vmem>>, %arg13: memref<2x8x32xf32, #tpu.memory_space<vmem>>, %arg14: memref<16x32xf32, #tpu.memory_space<vmem>>) attributes {dimension_semantics = [#tpu.dimension_semantics<parallel>], iteration_bounds = array<i64: 1>, scalar_prefetch = 0 : i64, scratch_operands = 1 : i64, tpu.core_type = #tpu.core_type<tc>, window_params = [{transform_indices = @transform_0, window_bounds = array<i64: 2, 8, 32>}, {pipeline_mode = #tpu.pipeline_mode<synchronous>, transform_indices = @transform_1, window_bounds = array<i64: 1, 32>}, {pipeline_mode = #tpu.pipeline_mode<synchronous>, transform_indices = @transform_2, window_bounds = array<i64: 1, 32>}, {pipeline_mode = #tpu.pipeline_mode<synchronous>, transform_indices = @transform_3, window_bounds = array<i64: 1, 32>}, {pipeline_mode = #tpu.pipeline_mode<synchronous>, transform_indices = @transform_4, window_bounds = array<i64: 1, 32>}, {pipeline_mode = #tpu.pipeline_mode<synchronous>, transform_indices = @transform_5, window_bounds = array<i64: 32, 96>}, {pipeline_mode = #tpu.pipeline_mode<synchronous>, transform_indices = @transform_6, window_bounds = array<i64: 32, 32>}, {pipeline_mode = #tpu.pipeline_mode<synchronous>, transform_indices = @transform_7, window_bounds = array<i64: 1, 32>}, {pipeline_mode = #tpu.pipeline_mode<synchronous>, transform_indices = @transform_8, window_bounds = array<i64: 32, 128>}, {pipeline_mode = #tpu.pipeline_mode<synchronous>, transform_indices = @transform_9, window_bounds = array<i64: 1, 128>}, {pipeline_mode = #tpu.pipeline_mode<synchronous>, transform_indices = @transform_10, window_bounds = array<i64: 128, 32>}, {pipeline_mode = #tpu.pipeline_mode<synchronous>, transform_indices = @transform_11, window_bounds = array<i64: 1, 32>}, {transform_indices = @transform_12, window_bounds = array<i64: 2, 8, 32>}]} {
    %c0 = arith.constant 0 : index
    %c0_0 = arith.constant 0 : index
    %0 = vector.load %arg2[%c0, %c0_0] : memref<1x32xf32, #tpu.memory_space<vmem>>, vector<1x32xf32>
    %c0_1 = arith.constant 0 : index
    %c0_2 = arith.constant 0 : index
    %1 = vector.load %arg3[%c0_1, %c0_2] : memref<1x32xf32, #tpu.memory_space<vmem>>, vector<1x32xf32>
    %c0_3 = arith.constant 0 : index
    %c0_4 = arith.constant 0 : index
    %2 = vector.load %arg4[%c0_3, %c0_4] : memref<1x32xf32, #tpu.memory_space<vmem>>, vector<1x32xf32>
    %c0_5 = arith.constant 0 : index
    %c0_6 = arith.constant 0 : index
    %3 = vector.load %arg5[%c0_5, %c0_6] : memref<1x32xf32, #tpu.memory_space<vmem>>, vector<1x32xf32>
    %c0_7 = arith.constant 0 : index
    %c0_8 = arith.constant 0 : index
    %4 = vector.load %arg8[%c0_7, %c0_8] : memref<1x32xf32, #tpu.memory_space<vmem>>, vector<1x32xf32>
    %c0_9 = arith.constant 0 : index
    %c0_10 = arith.constant 0 : index
    %5 = vector.load %arg10[%c0_9, %c0_10] : memref<1x128xf32, #tpu.memory_space<vmem>>, vector<1x128xf32>
    %c0_11 = arith.constant 0 : index
    %c0_12 = arith.constant 0 : index
    %6 = vector.load %arg12[%c0_11, %c0_12] : memref<1x32xf32, #tpu.memory_space<vmem>>, vector<1x32xf32>
    %7 = tpu.iota {dimensions = array<i32: 0>} : vector<8x8xi32>
    %8 = tpu.iota {dimensions = array<i32: 1>} : vector<8x8xi32>
    %9 = arith.cmpi sgt, %8, %7 : vector<8x8xi32>
    %cst = arith.constant -1.000000e+30 : f32
    %cst_13 = arith.constant 0.000000e+00 : f32
    %10 = vector.broadcast %cst : f32 to vector<8x8xf32>
    %11 = vector.broadcast %cst_13 : f32 to vector<8x8xf32>
    %12 = arith.select %9, %10, %11 : vector<8x8xi1>, vector<8x8xf32>
    %13 = vector.shape_cast %12 : vector<8x8xf32> to vector<1x8x8xf32>
    %14 = vector.broadcast %13 : vector<1x8x8xf32> to vector<2x8x8xf32>
    %c0_14 = arith.constant 0 : index
    %c0_15 = arith.constant 0 : index
    %c0_16 = arith.constant 0 : index
    %15 = vector.load %arg1[%c0_14, %c0_15, %c0_16] : memref<2x8x32xf32, #tpu.memory_space<vmem>>, vector<2x8x32xf32>
    %16 = vector.shape_cast %15 : vector<2x8x32xf32> to vector<16x32xf32>
    %cst_17 = arith.constant dense<0.000000e+00> : vector<16xf32>
    %17 = vector.multi_reduction <add>, %16, %cst_17 [1] : vector<16x32xf32> to vector<16xf32>
    %18 = vector.shape_cast %17 : vector<16xf32> to vector<16x1xf32>
    %cst_18 = arith.constant 3.200000e+01 : f32
    %19 = vector.broadcast %cst_18 : f32 to vector<16x1xf32>
    %20 = arith.divf %18, %19 : vector<16x1xf32>
    %21 = vector.broadcast %20 : vector<16x1xf32> to vector<16x32xf32>
    %22 = arith.subf %16, %21 : vector<16x32xf32>
    %23 = arith.mulf %22, %22 : vector<16x32xf32>
    %cst_19 = arith.constant dense<0.000000e+00> : vector<16xf32>
    %24 = vector.multi_reduction <add>, %23, %cst_19 [1] : vector<16x32xf32> to vector<16xf32>
    %25 = vector.shape_cast %24 : vector<16xf32> to vector<16x1xf32>
    %cst_20 = arith.constant 0.0322580636 : f32
    %26 = vector.broadcast %cst_20 : f32 to vector<16x1xf32>
    %27 = arith.mulf %25, %26 : vector<16x1xf32>
    %28 = vector.broadcast %20 : vector<16x1xf32> to vector<16x32xf32>
    %29 = arith.subf %16, %28 : vector<16x32xf32>
    %cst_21 = arith.constant 9.99999974E-6 : f32
    %30 = vector.broadcast %cst_21 : f32 to vector<16x1xf32>
    %31 = arith.addf %27, %30 : vector<16x1xf32>
    %32 = math.sqrt %31 : vector<16x1xf32>
    %33 = vector.broadcast %32 : vector<16x1xf32> to vector<16x32xf32>
    %34 = arith.divf %29, %33 : vector<16x32xf32>
    %35 = vector.broadcast %0 : vector<1x32xf32> to vector<16x32xf32>
    %36 = arith.mulf %35, %34 : vector<16x32xf32>
    %37 = vector.broadcast %1 : vector<1x32xf32> to vector<16x32xf32>
    %38 = arith.addf %36, %37 : vector<16x32xf32>
    %39 = arith.truncf %38 : vector<16x32xf32> to vector<16x32xbf16>
    %c0_22 = arith.constant 0 : index
    %c0_23 = arith.constant 0 : index
    %40 = vector.load %arg6[%c0_22, %c0_23] : memref<32x96xbf16, #tpu.memory_space<vmem>>, vector<32x96xbf16>
    %cst_24 = arith.constant dense<0.000000e+00> : vector<16x96xf32>
    %41 = tpu.matmul %39, %40, %cst_24 {dimension_numbers = #tpu.dot_dimension_numbers<[1], [0], [0], [1], [0, 0, 1, 1], [], []>} : vector<16x32xbf16>, vector<32x96xbf16>, vector<16x96xf32> -> vector<16x96xf32>
    %42 = vector.extract_strided_slice %41 {offsets = [0, 0], sizes = [16, 32], strides = [1, 1]} : vector<16x96xf32> to vector<16x32xf32>
    %cst_25 = arith.constant 0.353553385 : f32
    %43 = vector.broadcast %cst_25 : f32 to vector<16x32xf32>
    %44 = arith.mulf %42, %43 : vector<16x32xf32>
    %45 = arith.truncf %44 : vector<16x32xf32> to vector<16x32xbf16>
    %46 = vector.shape_cast %45 : vector<16x32xbf16> to vector<2x8x32xbf16>
    %47 = vector.extract_strided_slice %41 {offsets = [0, 32], sizes = [16, 32], strides = [1, 1]} : vector<16x96xf32> to vector<16x32xf32>
    %48 = arith.truncf %47 : vector<16x32xf32> to vector<16x32xbf16>
    %49 = vector.shape_cast %48 : vector<16x32xbf16> to vector<2x8x32xbf16>
    %50 = vector.extract_strided_slice %41 {offsets = [0, 64], sizes = [16, 32], strides = [1, 1]} : vector<16x96xf32> to vector<16x32xf32>
    %51 = arith.truncf %50 : vector<16x32xf32> to vector<16x32xbf16>
    %52 = vector.shape_cast %51 : vector<16x32xbf16> to vector<2x8x32xbf16>
    %53 = vector.extract_strided_slice %46 {offsets = [0, 0, 0], sizes = [2, 8, 8], strides = [1, 1, 1]} : vector<2x8x32xbf16> to vector<2x8x8xbf16>
    %54 = vector.extract_strided_slice %49 {offsets = [0, 0, 0], sizes = [2, 8, 8], strides = [1, 1, 1]} : vector<2x8x32xbf16> to vector<2x8x8xbf16>
    "tpu.trace_start"() <{level = 10 : i32, message = "bqd,bkd->bqk"}> : () -> ()
    %cst_26 = arith.constant dense<0.000000e+00> : vector<2x8x8xf32>
    %55 = tpu.matmul %53, %54, %cst_26 {dimension_numbers = #tpu.dot_dimension_numbers<[2], [2], [1], [1], [0, 0, 0, 1, 1, 1], [0], [0]>} : vector<2x8x8xbf16>, vector<2x8x8xbf16>, vector<2x8x8xf32> -> vector<2x8x8xf32>
    "tpu.trace_stop"() : () -> ()
    %56 = arith.addf %55, %14 : vector<2x8x8xf32>
    %cst_27 = arith.constant dense<0xFF800000> : vector<2x8xf32>
    %57 = vector.multi_reduction <maximumf>, %56, %cst_27 [2] : vector<2x8x8xf32> to vector<2x8xf32>
    %58 = vector.shape_cast %57 : vector<2x8xf32> to vector<2x8x1xf32>
    %59 = vector.broadcast %58 : vector<2x8x1xf32> to vector<2x8x8xf32>
    %60 = arith.subf %56, %59 : vector<2x8x8xf32>
    %61 = math.exp %60 : vector<2x8x8xf32>
    %cst_28 = arith.constant dense<0.000000e+00> : vector<2x8xf32>
    %62 = vector.multi_reduction <add>, %61, %cst_28 [2] : vector<2x8x8xf32> to vector<2x8xf32>
    %63 = vector.shape_cast %62 : vector<2x8xf32> to vector<2x8x1xf32>
    %64 = vector.broadcast %63 : vector<2x8x1xf32> to vector<2x8x8xf32>
    %65 = arith.divf %61, %64 : vector<2x8x8xf32>
    %66 = arith.truncf %65 : vector<2x8x8xf32> to vector<2x8x8xbf16>
    %67 = vector.extract_strided_slice %52 {offsets = [0, 0, 0], sizes = [2, 8, 8], strides = [1, 1, 1]} : vector<2x8x32xbf16> to vector<2x8x8xbf16>
    "tpu.trace_start"() <{level = 10 : i32, message = "bqk,bkd->bqd"}> : () -> ()
    %cst_29 = arith.constant dense<0.000000e+00> : vector<2x8x8xf32>
    %68 = tpu.matmul %66, %67, %cst_29 {dimension_numbers = #tpu.dot_dimension_numbers<[2], [1], [1], [2], [0, 0, 0, 1, 1, 2], [0], [0]>} : vector<2x8x8xbf16>, vector<2x8x8xbf16>, vector<2x8x8xf32> -> vector<2x8x8xf32>
    "tpu.trace_stop"() : () -> ()
    %69 = vector.shape_cast %68 : vector<2x8x8xf32> to vector<16x8xf32>
    %c0_30 = arith.constant 0 : index
    %c0_31 = arith.constant 0 : index
    %70 = vector.load %arg14[%c0_30, %c0_31] : memref<16x32xf32, #tpu.memory_space<vmem>>, vector<16x8xf32>
    tpu.vector_store %arg14[%c0_30, %c0_31], %69 {strides = array<i32>} : memref<16x32xf32, #tpu.memory_space<vmem>>, vector<16x8xf32>,
    %71 = vector.extract_strided_slice %46 {offsets = [0, 0, 8], sizes = [2, 8, 8], strides = [1, 1, 1]} : vector<2x8x32xbf16> to vector<2x8x8xbf16>
    %72 = vector.extract_strided_slice %49 {offsets = [0, 0, 8], sizes = [2, 8, 8], strides = [1, 1, 1]} : vector<2x8x32xbf16> to vector<2x8x8xbf16>
    "tpu.trace_start"() <{level = 10 : i32, message = "bqd,bkd->bqk"}> : () -> ()
    %cst_32 = arith.constant dense<0.000000e+00> : vector<2x8x8xf32>
    %73 = tpu.matmul %71, %72, %cst_32 {dimension_numbers = #tpu.dot_dimension_numbers<[2], [2], [1], [1], [0, 0, 0, 1, 1, 1], [0], [0]>} : vector<2x8x8xbf16>, vector<2x8x8xbf16>, vector<2x8x8xf32> -> vector<2x8x8xf32>
    "tpu.trace_stop"() : () -> ()
    %74 = arith.addf %73, %14 : vector<2x8x8xf32>
    %cst_33 = arith.constant dense<0xFF800000> : vector<2x8xf32>
    %75 = vector.multi_reduction <maximumf>, %74, %cst_33 [2] : vector<2x8x8xf32> to vector<2x8xf32>
    %76 = vector.shape_cast %75 : vector<2x8xf32> to vector<2x8x1xf32>
    %77 = vector.broadcast %76 : vector<2x8x1xf32> to vector<2x8x8xf32>
    %78 = arith.subf %74, %77 : vector<2x8x8xf32>
    %79 = math.exp %78 : vector<2x8x8xf32>
    %cst_34 = arith.constant dense<0.000000e+00> : vector<2x8xf32>
    %80 = vector.multi_reduction <add>, %79, %cst_34 [2] : vector<2x8x8xf32> to vector<2x8xf32>
    %81 = vector.shape_cast %80 : vector<2x8xf32> to vector<2x8x1xf32>
    %82 = vector.broadcast %81 : vector<2x8x1xf32> to vector<2x8x8xf32>
    %83 = arith.divf %79, %82 : vector<2x8x8xf32>
    %84 = arith.truncf %83 : vector<2x8x8xf32> to vector<2x8x8xbf16>
    %85 = vector.extract_strided_slice %52 {offsets = [0, 0, 8], sizes = [2, 8, 8], strides = [1, 1, 1]} : vector<2x8x32xbf16> to vector<2x8x8xbf16>
    "tpu.trace_start"() <{level = 10 : i32, message = "bqk,bkd->bqd"}> : () -> ()
    %cst_35 = arith.constant dense<0.000000e+00> : vector<2x8x8xf32>
    %86 = tpu.matmul %84, %85, %cst_35 {dimension_numbers = #tpu.dot_dimension_numbers<[2], [1], [1], [2], [0, 0, 0, 1, 1, 2], [0], [0]>} : vector<2x8x8xbf16>, vector<2x8x8xbf16>, vector<2x8x8xf32> -> vector<2x8x8xf32>
    "tpu.trace_stop"() : () -> ()
    %87 = vector.shape_cast %86 : vector<2x8x8xf32> to vector<16x8xf32>
    %c0_36 = arith.constant 0 : index
    %c8 = arith.constant 8 : index
    %88 = vector.load %arg14[%c0_36, %c8] : memref<16x32xf32, #tpu.memory_space<vmem>>, vector<16x8xf32>
    tpu.vector_store %arg14[%c0_36, %c8], %87 {strides = array<i32>} : memref<16x32xf32, #tpu.memory_space<vmem>>, vector<16x8xf32>,
    %89 = vector.extract_strided_slice %46 {offsets = [0, 0, 16], sizes = [2, 8, 8], strides = [1, 1, 1]} : vector<2x8x32xbf16> to vector<2x8x8xbf16>
    %90 = vector.extract_strided_slice %49 {offsets = [0, 0, 16], sizes = [2, 8, 8], strides = [1, 1, 1]} : vector<2x8x32xbf16> to vector<2x8x8xbf16>
    "tpu.trace_start"() <{level = 10 : i32, message = "bqd,bkd->bqk"}> : () -> ()
    %cst_37 = arith.constant dense<0.000000e+00> : vector<2x8x8xf32>
    %91 = tpu.matmul %89, %90, %cst_37 {dimension_numbers = #tpu.dot_dimension_numbers<[2], [2], [1], [1], [0, 0, 0, 1, 1, 1], [0], [0]>} : vector<2x8x8xbf16>, vector<2x8x8xbf16>, vector<2x8x8xf32> -> vector<2x8x8xf32>
    "tpu.trace_stop"() : () -> ()
    %92 = arith.addf %91, %14 : vector<2x8x8xf32>
    %cst_38 = arith.constant dense<0xFF800000> : vector<2x8xf32>
    %93 = vector.multi_reduction <maximumf>, %92, %cst_38 [2] : vector<2x8x8xf32> to vector<2x8xf32>
    %94 = vector.shape_cast %93 : vector<2x8xf32> to vector<2x8x1xf32>
    %95 = vector.broadcast %94 : vector<2x8x1xf32> to vector<2x8x8xf32>
    %96 = arith.subf %92, %95 : vector<2x8x8xf32>
    %97 = math.exp %96 : vector<2x8x8xf32>
    %cst_39 = arith.constant dense<0.000000e+00> : vector<2x8xf32>
    %98 = vector.multi_reduction <add>, %97, %cst_39 [2] : vector<2x8x8xf32> to vector<2x8xf32>
    %99 = vector.shape_cast %98 : vector<2x8xf32> to vector<2x8x1xf32>
    %100 = vector.broadcast %99 : vector<2x8x1xf32> to vector<2x8x8xf32>
    %101 = arith.divf %97, %100 : vector<2x8x8xf32>
    %102 = arith.truncf %101 : vector<2x8x8xf32> to vector<2x8x8xbf16>
    %103 = vector.extract_strided_slice %52 {offsets = [0, 0, 16], sizes = [2, 8, 8], strides = [1, 1, 1]} : vector<2x8x32xbf16> to vector<2x8x8xbf16>
    "tpu.trace_start"() <{level = 10 : i32, message = "bqk,bkd->bqd"}> : () -> ()
    %cst_40 = arith.constant dense<0.000000e+00> : vector<2x8x8xf32>
    %104 = tpu.matmul %102, %103, %cst_40 {dimension_numbers = #tpu.dot_dimension_numbers<[2], [1], [1], [2], [0, 0, 0, 1, 1, 2], [0], [0]>} : vector<2x8x8xbf16>, vector<2x8x8xbf16>, vector<2x8x8xf32> -> vector<2x8x8xf32>
    "tpu.trace_stop"() : () -> ()
    %105 = vector.shape_cast %104 : vector<2x8x8xf32> to vector<16x8xf32>
    %c0_41 = arith.constant 0 : index
    %c16 = arith.constant 16 : index
    %106 = vector.load %arg14[%c0_41, %c16] : memref<16x32xf32, #tpu.memory_space<vmem>>, vector<16x8xf32>
    tpu.vector_store %arg14[%c0_41, %c16], %105 {strides = array<i32>} : memref<16x32xf32, #tpu.memory_space<vmem>>, vector<16x8xf32>,
    %107 = vector.extract_strided_slice %46 {offsets = [0, 0, 24], sizes = [2, 8, 8], strides = [1, 1, 1]} : vector<2x8x32xbf16> to vector<2x8x8xbf16>
    %108 = vector.extract_strided_slice %49 {offsets = [0, 0, 24], sizes = [2, 8, 8], strides = [1, 1, 1]} : vector<2x8x32xbf16> to vector<2x8x8xbf16>
    "tpu.trace_start"() <{level = 10 : i32, message = "bqd,bkd->bqk"}> : () -> ()
    %cst_42 = arith.constant dense<0.000000e+00> : vector<2x8x8xf32>
    %109 = tpu.matmul %107, %108, %cst_42 {dimension_numbers = #tpu.dot_dimension_numbers<[2], [2], [1], [1], [0, 0, 0, 1, 1, 1], [0], [0]>} : vector<2x8x8xbf16>, vector<2x8x8xbf16>, vector<2x8x8xf32> -> vector<2x8x8xf32>
    "tpu.trace_stop"() : () -> ()
    %110 = arith.addf %109, %14 : vector<2x8x8xf32>
    %cst_43 = arith.constant dense<0xFF800000> : vector<2x8xf32>
    %111 = vector.multi_reduction <maximumf>, %110, %cst_43 [2] : vector<2x8x8xf32> to vector<2x8xf32>
    %112 = vector.shape_cast %111 : vector<2x8xf32> to vector<2x8x1xf32>
    %113 = vector.broadcast %112 : vector<2x8x1xf32> to vector<2x8x8xf32>
    %114 = arith.subf %110, %113 : vector<2x8x8xf32>
    %115 = math.exp %114 : vector<2x8x8xf32>
    %cst_44 = arith.constant dense<0.000000e+00> : vector<2x8xf32>
    %116 = vector.multi_reduction <add>, %115, %cst_44 [2] : vector<2x8x8xf32> to vector<2x8xf32>
    %117 = vector.shape_cast %116 : vector<2x8xf32> to vector<2x8x1xf32>
    %118 = vector.broadcast %117 : vector<2x8x1xf32> to vector<2x8x8xf32>
    %119 = arith.divf %115, %118 : vector<2x8x8xf32>
    %120 = arith.truncf %119 : vector<2x8x8xf32> to vector<2x8x8xbf16>
    %121 = vector.extract_strided_slice %52 {offsets = [0, 0, 24], sizes = [2, 8, 8], strides = [1, 1, 1]} : vector<2x8x32xbf16> to vector<2x8x8xbf16>
    "tpu.trace_start"() <{level = 10 : i32, message = "bqk,bkd->bqd"}> : () -> ()
    %cst_45 = arith.constant dense<0.000000e+00> : vector<2x8x8xf32>
    %122 = tpu.matmul %120, %121, %cst_45 {dimension_numbers = #tpu.dot_dimension_numbers<[2], [1], [1], [2], [0, 0, 0, 1, 1, 2], [0], [0]>} : vector<2x8x8xbf16>, vector<2x8x8xbf16>, vector<2x8x8xf32> -> vector<2x8x8xf32>
    "tpu.trace_stop"() : () -> ()
    %123 = vector.shape_cast %122 : vector<2x8x8xf32> to vector<16x8xf32>
    %c0_46 = arith.constant 0 : index
    %c24 = arith.constant 24 : index
    %124 = vector.load %arg14[%c0_46, %c24] : memref<16x32xf32, #tpu.memory_space<vmem>>, vector<16x8xf32>
    tpu.vector_store %arg14[%c0_46, %c24], %123 {strides = array<i32>} : memref<16x32xf32, #tpu.memory_space<vmem>>, vector<16x8xf32>,
    %c0_47 = arith.constant 0 : index
    %c0_48 = arith.constant 0 : index
    %125 = vector.load %arg14[%c0_47, %c0_48] : memref<16x32xf32, #tpu.memory_space<vmem>>, vector<16x32xf32>
    %126 = arith.truncf %125 : vector<16x32xf32> to vector<16x32xbf16>
    %c0_49 = arith.constant 0 : index
    %c0_50 = arith.constant 0 : index
    %127 = vector.load %arg7[%c0_49, %c0_50] : memref<32x32xbf16, #tpu.memory_space<vmem>>, vector<32x32xbf16>
    %cst_51 = arith.constant dense<0.000000e+00> : vector<16x32xf32>
    %128 = tpu.matmul %126, %127, %cst_51 {dimension_numbers = #tpu.dot_dimension_numbers<[1], [0], [0], [1], [0, 0, 1, 1], [], []>} : vector<16x32xbf16>, vector<32x32xbf16>, vector<16x32xf32> -> vector<16x32xf32>
    %129 = vector.broadcast %4 : vector<1x32xf32> to vector<16x32xf32>
    %130 = arith.addf %128, %129 : vector<16x32xf32>
    %131 = arith.addf %130, %16 : vector<16x32xf32>
    %cst_52 = arith.constant dense<0.000000e+00> : vector<16xf32>
    %132 = vector.multi_reduction <add>, %131, %cst_52 [1] : vector<16x32xf32> to vector<16xf32>
    %133 = vector.shape_cast %132 : vector<16xf32> to vector<16x1xf32>
    %cst_53 = arith.constant 3.200000e+01 : f32
    %134 = vector.broadcast %cst_53 : f32 to vector<16x1xf32>
    %135 = arith.divf %133, %134 : vector<16x1xf32>
    %136 = vector.broadcast %135 : vector<16x1xf32> to vector<16x32xf32>
    %137 = arith.subf %131, %136 : vector<16x32xf32>
    %138 = arith.mulf %137, %137 : vector<16x32xf32>
    %cst_54 = arith.constant dense<0.000000e+00> : vector<16xf32>
    %139 = vector.multi_reduction <add>, %138, %cst_54 [1] : vector<16x32xf32> to vector<16xf32>
    %140 = vector.shape_cast %139 : vector<16xf32> to vector<16x1xf32>
    %cst_55 = arith.constant 0.0322580636 : f32
    %141 = vector.broadcast %cst_55 : f32 to vector<16x1xf32>
    %142 = arith.mulf %140, %141 : vector<16x1xf32>
    %143 = vector.broadcast %135 : vector<16x1xf32> to vector<16x32xf32>
    %144 = arith.subf %131, %143 : vector<16x32xf32>
    %cst_56 = arith.constant 9.99999974E-6 : f32
    %145 = vector.broadcast %cst_56 : f32 to vector<16x1xf32>
    %146 = arith.addf %142, %145 : vector<16x1xf32>
    %147 = math.sqrt %146 : vector<16x1xf32>
    %148 = vector.broadcast %147 : vector<16x1xf32> to vector<16x32xf32>
    %149 = arith.divf %144, %148 : vector<16x32xf32>
    %150 = vector.broadcast %2 : vector<1x32xf32> to vector<16x32xf32>
    %151 = arith.mulf %150, %149 : vector<16x32xf32>
    %152 = vector.broadcast %3 : vector<1x32xf32> to vector<16x32xf32>
    %153 = arith.addf %151, %152 : vector<16x32xf32>
    %154 = arith.truncf %153 : vector<16x32xf32> to vector<16x32xbf16>
    %c0_57 = arith.constant 0 : index
    %c0_58 = arith.constant 0 : index
    %155 = vector.load %arg9[%c0_57, %c0_58] : memref<32x128xbf16, #tpu.memory_space<vmem>>, vector<32x128xbf16>
    %cst_59 = arith.constant dense<0.000000e+00> : vector<16x128xf32>
    %156 = tpu.matmul %154, %155, %cst_59 {dimension_numbers = #tpu.dot_dimension_numbers<[1], [0], [0], [1], [0, 0, 1, 1], [], []>} : vector<16x32xbf16>, vector<32x128xbf16>, vector<16x128xf32> -> vector<16x128xf32>
    %157 = vector.broadcast %5 : vector<1x128xf32> to vector<16x128xf32>
    %158 = arith.addf %156, %157 : vector<16x128xf32>
    %cst_60 = arith.constant 0.636619746 : f32
    %159 = math.sqrt %cst_60 : f32
    %cst_61 = arith.constant 5.000000e-01 : f32
    %160 = vector.broadcast %cst_61 : f32 to vector<16x128xf32>
    %161 = arith.mulf %160, %158 : vector<16x128xf32>
    %cst_62 = arith.constant 4.471500e-02 : f32
    %162 = vector.broadcast %cst_62 : f32 to vector<16x128xf32>
    %163 = arith.mulf %162, %158 : vector<16x128xf32>
    %164 = arith.mulf %163, %158 : vector<16x128xf32>
    %165 = arith.mulf %164, %158 : vector<16x128xf32>
    %166 = arith.addf %158, %165 : vector<16x128xf32>
    %167 = vector.broadcast %159 : f32 to vector<16x128xf32>
    %168 = arith.mulf %167, %166 : vector<16x128xf32>
    %169 = math.tanh %168 : vector<16x128xf32>
    %cst_63 = arith.constant 1.000000e+00 : f32
    %170 = vector.broadcast %cst_63 : f32 to vector<16x128xf32>
    %171 = arith.addf %170, %169 : vector<16x128xf32>
    %172 = arith.mulf %161, %171 : vector<16x128xf32>
    %173 = arith.truncf %172 : vector<16x128xf32> to vector<16x128xbf16>
    %c0_64 = arith.constant 0 : index
    %c0_65 = arith.constant 0 : index
    %174 = vector.load %arg11[%c0_64, %c0_65] : memref<128x32xbf16, #tpu.memory_space<vmem>>, vector<128x32xbf16>
    %cst_66 = arith.constant dense<0.000000e+00> : vector<16x32xf32>
    %175 = tpu.matmul %173, %174, %cst_66 {dimension_numbers = #tpu.dot_dimension_numbers<[1], [0], [0], [1], [0, 0, 1, 1], [], []>} : vector<16x128xbf16>, vector<128x32xbf16>, vector<16x32xf32> -> vector<16x32xf32>
    %176 = vector.broadcast %6 : vector<1x32xf32> to vector<16x32xf32>
    %177 = arith.addf %175, %176 : vector<16x32xf32>
    %178 = arith.addf %177, %131 : vector<16x32xf32>
    %179 = vector.shape_cast %178 : vector<16x32xf32> to vector<2x8x32xf32>
    %c0_67 = arith.constant 0 : index
    %c0_68 = arith.constant 0 : index
    %c0_69 = arith.constant 0 : index
    %180 = vector.load %arg13[%c0_67, %c0_68, %c0_69] : memref<2x8x32xf32, #tpu.memory_space<vmem>>, vector<2x8x32xf32>
    tpu.vector_store %arg13[%c0_67, %c0_68, %c0_69], %179 {strides = array<i32>} : memref<2x8x32xf32, #tpu.memory_space<vmem>>, vector<2x8x32xf32>,
    return
  }
  func.func @transform_0(%arg0: i32) -> (i32, i32, i32) {
    %c0_i32 = arith.constant 0 : i32
    %c0_i32_0 = arith.constant 0 : i32
    %c0_i32_1 = arith.constant 0 : i32
    return %arg0, %c0_i32, %c0_i32_0 : i32, i32, i32
  }
  func.func @transform_1(%arg0: i32) -> (i32, i32) {
    %c0_i32 = arith.constant 0 : i32
    %c0_i32_0 = arith.constant 0 : i32
    %c0_i32_1 = arith.constant 0 : i32
    return %c0_i32, %c0_i32_0 : i32, i32
  }
  func.func @transform_2(%arg0: i32) -> (i32, i32) {
    %c0_i32 = arith.constant 0 : i32
    %c0_i32_0 = arith.constant 0 : i32
    %c0_i32_1 = arith.constant 0 : i32
    return %c0_i32, %c0_i32_0 : i32, i32
  }
  func.func @transform_3(%arg0: i32) -> (i32, i32) {
    %c0_i32 = arith.constant 0 : i32
    %c0_i32_0 = arith.constant 0 : i32
    %c0_i32_1 = arith.constant 0 : i32
    return %c0_i32, %c0_i32_0 : i32, i32
  }
  func.func @transform_4(%arg0: i32) -> (i32, i32) {
    %c0_i32 = arith.constant 0 : i32
    %c0_i32_0 = arith.constant 0 : i32
    %c0_i32_1 = arith.constant 0 : i32
    return %c0_i32, %c0_i32_0 : i32, i32
  }
  func.func @transform_5(%arg0: i32) -> (i32, i32) {
    %c0_i32 = arith.constant 0 : i32
    %c0_i32_0 = arith.constant 0 : i32
    %c0_i32_1 = arith.constant 0 : i32
    return %c0_i32, %c0_i32_0 : i32, i32
  }
  func.func @transform_6(%arg0: i32) -> (i32, i32) {
    %c0_i32 = arith.constant 0 : i32
    %c0_i32_0 = arith.constant 0 : i32
    %c0_i32_1 = arith.constant 0 : i32
    return %c0_i32, %c0_i32_0 : i32, i32
  }
  func.func @transform_7(%arg0: i32) -> (i32, i32) {
    %c0_i32 = arith.constant 0 : i32
    %c0_i32_0 = arith.constant 0 : i32
    %c0_i32_1 = arith.constant 0 : i32
    return %c0_i32, %c0_i32_0 : i32, i32
  }
  func.func @transform_8(%arg0: i32) -> (i32, i32) {
    %c0_i32 = arith.constant 0 : i32
    %c0_i32_0 = arith.constant 0 : i32
    %c0_i32_1 = arith.constant 0 : i32
    return %c0_i32, %c0_i32_0 : i32, i32
  }
  func.func @transform_9(%arg0: i32) -> (i32, i32) {
    %c0_i32 = arith.constant 0 : i32
    %c0_i32_0 = arith.constant 0 : i32
    %c0_i32_1 = arith.constant 0 : i32
    return %c0_i32, %c0_i32_0 : i32, i32
  }
  func.func @transform_10(%arg0: i32) -> (i32, i32) {
    %c0_i32 = arith.constant 0 : i32
    %c0_i32_0 = arith.constant 0 : i32
    %c0_i32_1 = arith.constant 0 : i32
    return %c0_i32, %c0_i32_0 : i32, i32
  }
  func.func @transform_11(%arg0: i32) -> (i32, i32) {
    %c0_i32 = arith.constant 0 : i32
    %c0_i32_0 = arith.constant 0 : i32
    %c0_i32_1 = arith.constant 0 : i32
    return %c0_i32, %c0_i32_0 : i32, i32
  }
  func.func @transform_12(%arg0: i32) -> (i32, i32, i32) {
    %c0_i32 = arith.constant 0 : i32
    %c0_i32_0 = arith.constant 0 : i32
    %c0_i32_1 = arith.constant 0 : i32
    return %arg0, %c0_i32, %c0_i32_0 : i32, i32, i32
  }
}

</mosaic_0001>

<llo_original>
// kernel: tpu_custom_call.1
$region0: #{tpu_custom_call.1}
  #allocation0 [shape = 'u32[]', space=smem, size = 0x4, offset = 0x4, fixed_abs, tag = 'smem constant byte address 0x4 - core index']
  #allocation1 [shape = 'u32[72,128]{1,0:T(1,128)}', space=vmem, size = 0x9000, scoped, tag = 'internal scratch']
  #allocation2 [shape = 'f32[16,32]{1,0:T(8,128)}', space=vmem, size = 0x2000, scoped, tag = 'scratch operand']
  %s0 = inlined_call_operand.vmem [shape: f32[2,8,32], index: 0, kind: input, shape index: {}]
  %s1 = inlined_call_operand.vmem [shape: f32[1,32], index: 1, kind: input, shape index: {}]
  %s2 = inlined_call_operand.vmem [shape: f32[1,32], index: 2, kind: input, shape index: {}]
  %s3 = inlined_call_operand.vmem [shape: f32[1,32], index: 3, kind: input, shape index: {}]
  %s4 = inlined_call_operand.vmem [shape: f32[1,32], index: 4, kind: input, shape index: {}]
  %s5 = inlined_call_operand.vmem [shape: bf16[32,96], index: 5, kind: input, shape index: {}]
  %s6 = inlined_call_operand.vmem [shape: bf16[32,32], index: 6, kind: input, shape index: {}]
  %s7 = inlined_call_operand.vmem [shape: f32[1,32], index: 7, kind: input, shape index: {}]
  %s8 = inlined_call_operand.vmem [shape: bf16[32,128], index: 8, kind: input, shape index: {}]
  %s9 = inlined_call_operand.vmem [shape: f32[1,128], index: 9, kind: input, shape index: {}]
  %s10 = inlined_call_operand.vmem [shape: bf16[128,32], index: 10, kind: input, shape index: {}]
  %s11 = inlined_call_operand.vmem [shape: f32[1,32], index: 11, kind: input, shape index: {}]
  %s12 = inlined_call_operand.hbm [shape: f32[2,8,32], index: 12, kind: output, shape index: {}]
  %s13 = sld [smem:[#allocation0]]
  $region58: #{tpu_custom_call.1} parent=0
    _
  %s15 = ssub.s32 1, %s13
  %s16 = scalar_select 0, %s15, %s13
  $region1: #{tpu_custom_call.1} parent=0
    #allocation3 [shape = 'u8[8192]{0}', space=vmem, size = 0x2000, scoped, tag = 'output window, operand 0, single buffered']
    #allocation4 [shape = 's32[1]{0}', space=sflag, size = 0x4, scoped, tag = 'scoped memory for tpu_custom_call.1']
    %17 = vsyncpa [#allocation4], 0
    // Predicated region
    $region2: #{tpu_custom_call.1} parent=1 // pred_check
      _
    $region3: #{tpu_custom_call.1} parent=1 // pred_check_branch
      %19 = sbr.rel (0) target = $region5
    $region4: #{tpu_custom_call.1} parent=1 // pred_region
      _
    $region5: #{tpu_custom_call.1} parent=1 // pred_fallthru
      _
    // Predicated region
    $region6: #{tpu_custom_call.1} parent=1 // pred_check
      _
    $region7: #{tpu_custom_call.1} parent=1 // pred_check_branch
      %21 = sbr.rel (0) target = $region9
    $region8: #{tpu_custom_call.1} parent=1 // pred_region
      _
    $region9: #{tpu_custom_call.1} parent=1 // pred_fallthru
      _
    // Predicated region
    $region10: #{tpu_custom_call.1} parent=1 // pred_check
      _
    $region11: #{tpu_custom_call.1} parent=1 // pred_check_branch
      %23 = sbr.rel (0) target = $region13
    $region12: #{tpu_custom_call.1} parent=1 // pred_region
      _
    $region13: #{tpu_custom_call.1} parent=1 // pred_fallthru
      _
    // Predicated region
    $region14: #{tpu_custom_call.1} parent=1 // pred_check
      _
    $region15: #{tpu_custom_call.1} parent=1 // pred_check_branch
      %25 = sbr.rel (0) target = $region17
    $region16: #{tpu_custom_call.1} parent=1 // pred_region
      _
    $region17: #{tpu_custom_call.1} parent=1 // pred_fallthru
      _
    // Predicated region
    $region18: #{tpu_custom_call.1} parent=1 // pred_check
      _
    $region19: #{tpu_custom_call.1} parent=1 // pred_check_branch
      %27 = sbr.rel (0) target = $region21
    $region20: #{tpu_custom_call.1} parent=1 // pred_region
      _
    $region21: #{tpu_custom_call.1} parent=1 // pred_fallthru
      _
    // Predicated region
    $region22: #{tpu_custom_call.1} parent=1 // pred_check
      _
    $region23: #{tpu_custom_call.1} parent=1 // pred_check_branch
      %29 = sbr.rel (0) target = $region25
    $region24: #{tpu_custom_call.1} parent=1 // pred_region
      _
    $region25: #{tpu_custom_call.1} parent=1 // pred_fallthru
      _
    // Predicated region
    $region26: #{tpu_custom_call.1} parent=1 // pred_check
      _
    $region27: #{tpu_custom_call.1} parent=1 // pred_check_branch
      %31 = sbr.rel (0) target = $region29
    $region28: #{tpu_custom_call.1} parent=1 // pred_region
      _
    $region29: #{tpu_custom_call.1} parent=1 // pred_fallthru
      _
    // Predicated region
    $region30: #{tpu_custom_call.1} parent=1 // pred_check
      _
    $region31: #{tpu_custom_call.1} parent=1 // pred_check_branch
      %33 = sbr.rel (0) target = $region33
    $region32: #{tpu_custom_call.1} parent=1 // pred_region
      _
    $region33: #{tpu_custom_call.1} parent=1 // pred_fallthru
      _
    // Predicated region
    $region34: #{tpu_custom_call.1} parent=1 // pred_check
      _
    $region35: #{tpu_custom_call.1} parent=1 // pred_check_branch
      %35 = sbr.rel (0) target = $region37
    $region36: #{tpu_custom_call.1} parent=1 // pred_region
      _
    $region37: #{tpu_custom_call.1} parent=1 // pred_fallthru
      _
    // Predicated region
    $region38: #{tpu_custom_call.1} parent=1 // pred_check
      _
    $region39: #{tpu_custom_call.1} parent=1 // pred_check_branch
      %37 = sbr.rel (0) target = $region41
    $region40: #{tpu_custom_call.1} parent=1 // pred_region
      _
    $region41: #{tpu_custom_call.1} parent=1 // pred_fallthru
      _
    // Predicated region
    $region42: #{tpu_custom_call.1} parent=1 // pred_check
      _
    $region43: #{tpu_custom_call.1} parent=1 // pred_check_branch
      %39 = sbr.rel (0) target = $region45
    $region44: #{tpu_custom_call.1} parent=1 // pred_region
      _
    $region45: #{tpu_custom_call.1} parent=1 // pred_fallthru
      _
    // Predicated region
    $region46: #{tpu_custom_call.1} parent=1 // pred_check
      _
    $region47: #{tpu_custom_call.1} parent=1 // pred_check_branch
      %41 = sbr.rel (0) target = $region49
    $region48: #{tpu_custom_call.1} parent=1 // pred_region
      _
    $region49: #{tpu_custom_call.1} parent=1 // pred_fallthru
      _
    %v43 = vld [vmem:[%s1] sm:$0x1]
    %v44 = vld [vmem:[%s2] sm:$0x1]
    %v45 = vld [vmem:[%s3] sm:$0x1]
    %v46 = vld [vmem:[%s4] sm:$0x1]
    %v47 = vld [vmem:[%s7] sm:$0x1]
    %v48 = vld [vmem:[%s9] sm:$0x1]
    %v49 = vld [vmem:[%s11] sm:$0x1]
    %v50 = vlaneseq
    %v51 = vshrl.u32 %v50, 7
    %v52 = vlaneseq
    %v53 = vand.u32 %v52, 127
    %vm54 = vcmp.gt.s32.totalorder %v53, %v51
    %v55 = vsel %vm54, -1e+30, 0.0
    %v56 = vld [vmem:[%s0] sm:$0xff]
    %v57 = vld [vmem:[%s0 + $0x8] sm:$0xff]
    %vm58 = vcmask 261120
    %v59 = vsel %vm58, %v56, 0.0
    %60 = vadd.xlane.f32.xlu0 %v59
    %v61 = vpop.xlane.xlu0 %60
    %v62 = vsel %vm58, %v57, 0.0
    %63 = vadd.xlane.f32.xlu0 %v62
    %v64 = vpop.xlane.xlu0 %63
    %v65 = vrcp.pop 32.0
    %v66 = vmul.f32 32.0, %v65
    %v67 = vsub.f32 1.0, %v66
    %v68 = vmul.f32 %v65, %v67
    %v69 = vadd.f32 %v65, %v68
    %vm70 = vweird.f32 %v65
    %v71 = vsel %vm70, %v65, %v69
    %v72 = vmul.f32 %v61, %v71
    %v73 = vmul.f32 %v64, %v71
    %v74 = vsub.f32 %v56, %v72
    %v75 = vsub.f32 %v57, %v73
    %v76 = vmul.f32 %v74, %v74
    %v77 = vmul.f32 %v75, %v75
    %v78 = vsel %vm58, %v76, 0.0
    %79 = vadd.xlane.f32.xlu0 %v78
    %v80 = vpop.xlane.xlu0 %79
    %v81 = vsel %vm58, %v77, 0.0
    %82 = vadd.xlane.f32.xlu0 %v81
    %v83 = vpop.xlane.xlu0 %82
    %v84 = vmul.f32 %v80, 0.032258064
    %v85 = vmul.f32 %v83, 0.032258064
    %v86 = vadd.f32 %v84, 1e-05
    %v87 = vadd.f32 %v85, 1e-05
    %v88 = vrsqrt.pop %v86
    %v89 = vmul.f32 %v88, %v86
    %v90 = vmul.f32 %v89, %v88
    %v91 = vmul.f32 0.5, %v90
    %v92 = vsub.f32 1.5, %v91
    %v93 = vmul.f32 %v88, %v92
    %v94 = vmul.f32 %v86, %v93
    %vm95 = vcmp.eq.f32.partialorder %v86, inf
    %v96 = vsel %vm95, %v86, %v94
    %vm97 = vcmp.eq.f32.partialorder %v86, 0.0
    %v98 = vand.u32 %v86, 2147483648
    %v99 = vsel %vm97, %v98, %v96
    %v100 = vrsqrt.pop %v87
    %v101 = vmul.f32 %v100, %v87
    %v102 = vmul.f32 %v101, %v100
    %v103 = vmul.f32 0.5, %v102
    %v104 = vsub.f32 1.5, %v103
    %v105 = vmul.f32 %v100, %v104
    %v106 = vmul.f32 %v87, %v105
    %vm107 = vcmp.eq.f32.partialorder %v87, inf
    %v108 = vsel %vm107, %v87, %v106
    %vm109 = vcmp.eq.f32.partialorder %v87, 0.0
    %v110 = vand.u32 %v87, 2147483648
    %v111 = vsel %vm109, %v110, %v108
    %v112 = vrcp.pop %v99
    %v113 = vmul.f32 %v99, %v112
    %v114 = vsub.f32 1.0, %v113
    %v115 = vmul.f32 %v112, %v114
    %v116 = vadd.f32 %v112, %v115
    %vm117 = vweird.f32 %v99
    %vm118 = vweird.f32 %v112
    %vm119 = vmor %vm117, %vm118
    %v120 = vsel %vm119, %v112, %v116
    %v121 = vand.u32 2147483647, %v99
    %vm122 = vcmp.eq.f32.partialorder %v121, 8.507059e+37
    %v123 = vand.u32 %v99, 2147483648
    %v124 = vor.u32 1.1754944e-38, %v123
    %v125 = vsel %vm122, %v124, %v120
    %v126 = vmul.f32 %v74, %v125
    %v127 = vrcp.pop %v111
    %v128 = vmul.f32 %v111, %v127
    %v129 = vsub.f32 1.0, %v128
    %v130 = vmul.f32 %v127, %v129
    %v131 = vadd.f32 %v127, %v130
    %vm132 = vweird.f32 %v111
    %vm133 = vweird.f32 %v127
    %vm134 = vmor %vm132, %vm133
    %v135 = vsel %vm134, %v127, %v131
    %v136 = vand.u32 2147483647, %v111
    %vm137 = vcmp.eq.f32.partialorder %v136, 8.507059e+37
    %v138 = vand.u32 %v111, 2147483648
    %v139 = vor.u32 1.1754944e-38, %v138
    %v140 = vsel %vm137, %v139, %v135
    %v141 = vmul.f32 %v75, %v140
    %v143 = vperm.slane %v43, 0
    %v145 = vmul.f32 %v143, %v126
    %v146 = vmul.f32 %v143, %v141
    %v148 = vperm.slane %v44, 0
    %v150 = vadd.f32 %v145, %v148
    %v151 = vadd.f32 %v146, %v148
    %v152 = vpack.c.bf16 %v151, %v150
    %v153 = vld [vmem:[%s5] sm:$0xf]
    %v154 = vld [vmem:[%s5 + $0x4] sm:$0xf]
    %v155 = vld [vmem:[%s5 + $0x8] sm:$0xf]
    %v156 = vld [vmem:[%s5 + $0xc] sm:$0xf]
    %v161 = vunpack.c.l.b16 %v153
    %v162 = vunpack.c.l.b16 %v154
    %v163 = vunpack.c.l.b16 %v155
    %v164 = vunpack.c.l.b16 %v156
    %v165 = vpack.c.b16 %v162, %v161
    %v166 = vpack.c.b16 %v164, %v163
    %v170 = vsel %vm58, %v152, 0
    %172 = vmatpush.bf16.msra.mxu0 0
    %173 = vmatpush.bf16.msra.mxu0 0
    %174 = vmatpush.bf16.msra.mxu0 0
    %175 = vmatpush.bf16.msra.mxu0 0
    %176 = vmatpush.bf16.msra.mxu0 0
    %177 = vmatpush.bf16.msra.mxu0 0
    %178 = vmatpush.bf16.msra.mxu0 %v166
    %179 = vmatpush.bf16.msra.mxu0 %v165
    %180 = vmatmul.bf16.gmra.mxu0 %v170
    %v181 = vpop.f32.mrf.mxu0
    %v182 = vadd.f32 0.0, %v181
    %v183 = vpop.f32.mrf.mxu0
    %v184 = vadd.f32 0.0, %v183
    %185 = vdwg.mxu0
    %v186 = vmul.f32 %v182, 0.35355338
    %v187 = vmul.f32 %v184, 0.35355338
    %v188 = vpack.c.bf16 %v186, %v186
    %v189 = vpack.c.bf16 %v187, %v187
    %v190 = vpack.c.bf16 %v182, %v182
    %v191 = vpack.c.bf16 %v184, %v184
    %v193 = vunpack.c.l.b16 %v190
    %v194 = vpack.c.b16 %v193, %v193
    %195 = vrot.lane.b32.xlu0 %v194, 96
    %v196 = vpop.permute.xlu0 %195
    %vm197 = vcmask 64512
    %v199 = vsel %vm197, %v188, 0
    %v202 = vsel %vm197, %v196, 0
    %204 = vmatpush.bf16.xpose.msra.mxu0 0
    %205 = vmatpush.bf16.xpose.msra.mxu0 0
    %206 = vmatpush.bf16.xpose.msra.mxu0 0
    %207 = vmatpush.bf16.xpose.msra.mxu0 0
    %208 = vmatpush.bf16.xpose.msra.mxu0 0
    %209 = vmatpush.bf16.xpose.msra.mxu0 0
    %210 = vmatpush.bf16.xpose.msra.mxu0 0
    %211 = vmatpush.bf16.xpose.msra.mxu0 %v202
    %212 = vmatmul.bf16.gmra.mxu0 %v199
    %v213 = vpop.f32.mrf.mxu0
    %v214 = vadd.f32 %v55, %v213
    %v215 = vpop.f32.mrf.mxu0
    %216 = vdwg.mxu0
    %v218 = vunpack.c.l.b16 %v191
    %v219 = vpack.c.b16 %v218, %v218
    %220 = vrot.lane.b32.xlu0 %v219, 96
    %v221 = vpop.permute.xlu0 %220
    %v223 = vsel %vm197, %v189, 0
    %v226 = vsel %vm197, %v221, 0
    %228 = vmatpush.bf16.xpose.msra.mxu0 0
    %229 = vmatpush.bf16.xpose.msra.mxu0 0
    %230 = vmatpush.bf16.xpose.msra.mxu0 0
    %231 = vmatpush.bf16.xpose.msra.mxu0 0
    %232 = vmatpush.bf16.xpose.msra.mxu0 0
    %233 = vmatpush.bf16.xpose.msra.mxu0 0
    %234 = vmatpush.bf16.xpose.msra.mxu0 0
    %235 = vmatpush.bf16.xpose.msra.mxu0 %v226
    %236 = vmatmul.bf16.gmra.mxu0 %v223
    %v237 = vpop.f32.mrf.mxu0
    %v238 = vadd.f32 %v55, %v237
    %v239 = vpop.f32.mrf.mxu0
    %240 = vdwg.mxu0
    %v241 = vsel %vm197, %v214, -inf
    %242 = vmax.xlane.f32.xlu0 %v241
    %v243 = vpop.xlane.xlu0 %242
    %v244 = vsel %vm197, %v238, -inf
    %245 = vmax.xlane.f32.xlu0 %v244
    %v246 = vpop.xlane.xlu0 %245
    %v247 = vsub.f32 %v214, %v243
    %v248 = vsub.f32 %v238, %v246
    %v249 = vmul.f32 %v247, 1.442695
    %v250 = vpow.pop %v249
    %v251 = vmul.f32 %v248, 1.442695
    %v252 = vpow.pop %v251
    %v253 = vsel %vm197, %v250, 0.0
    %254 = vadd.xlane.f32.xlu0 %v253
    %v255 = vpop.xlane.xlu0 %254
    %v256 = vsel %vm197, %v252, 0.0
    %257 = vadd.xlane.f32.xlu0 %v256
    %v258 = vpop.xlane.xlu0 %257
    %v259 = vrcp.pop %v255
    %v260 = vmul.f32 %v255, %v259
    %v261 = vsub.f32 1.0, %v260
    %v262 = vmul.f32 %v259, %v261
    %v263 = vadd.f32 %v259, %v262
    %vm264 = vweird.f32 %v255
    %vm265 = vweird.f32 %v259
    %vm266 = vmor %vm264, %vm265
    %v267 = vsel %vm266, %v259, %v263
    %v268 = vand.u32 2147483647, %v255
    %vm269 = vcmp.eq.f32.partialorder %v268, 8.507059e+37
    %v270 = vand.u32 %v255, 2147483648
    %v271 = vor.u32 1.1754944e-38, %v270
    %v272 = vsel %vm269, %v271, %v267
    %v273 = vmul.f32 %v250, %v272
    %v274 = vrcp.pop %v258
    %v275 = vmul.f32 %v258, %v274
    %v276 = vsub.f32 1.0, %v275
    %v277 = vmul.f32 %v274, %v276
    %v278 = vadd.f32 %v274, %v277
    %vm279 = vweird.f32 %v258
    %vm280 = vweird.f32 %v274
    %vm281 = vmor %vm279, %vm280
    %v282 = vsel %vm281, %v274, %v278
    %v283 = vand.u32 2147483647, %v258
    %vm284 = vcmp.eq.f32.partialorder %v283, 8.507059e+37
    %v285 = vand.u32 %v258, 2147483648
    %v286 = vor.u32 1.1754944e-38, %v285
    %v287 = vsel %vm284, %v286, %v282
    %v288 = vmul.f32 %v252, %v287
    %v289 = vpack.c.bf16 %v273, %v273
    %v290 = vpack.c.bf16 %v288, %v288
    %291 = vrot.lane.b32.xlu0 %v194, 64
    %v292 = vpop.permute.xlu0 %291
    %v294 = vsel %vm197, %v289, 0
    %vm296 = vcmask 1043456
    %v298 = vsel %vm296, %v292, 0
    %300 = vmatpush.bf16.msra.mxu0 0
    %301 = vmatpush.bf16.msra.mxu0 0
    %302 = vmatpush.bf16.msra.mxu0 0
    %303 = vmatpush.bf16.msra.mxu0 0
    %304 = vmatpush.bf16.msra.mxu0 0
    %305 = vmatpush.bf16.msra.mxu0 0
    %306 = vmatpush.bf16.msra.mxu0 0
    %307 = vmatpush.bf16.msra.mxu0 %v298
    %308 = vmatmul.bf16.gmra.mxu0 %v294
    %v309 = vpop.f32.mrf.mxu0
    %v310 = vadd.f32 0.0, %v309
    %v311 = vpop.f32.mrf.mxu0
    %312 = vdwg.mxu0
    %313 = vrot.lane.b32.xlu0 %v219, 64
    %v314 = vpop.permute.xlu0 %313
    %v316 = vsel %vm197, %v290, 0
    %v319 = vsel %vm296, %v314, 0
    %321 = vmatpush.bf16.msra.mxu0 0
    %322 = vmatpush.bf16.msra.mxu0 0
    %323 = vmatpush.bf16.msra.mxu0 0
    %324 = vmatpush.bf16.msra.mxu0 0
    %325 = vmatpush.bf16.msra.mxu0 0
    %326 = vmatpush.bf16.msra.mxu0 0
    %327 = vmatpush.bf16.msra.mxu0 0
    %328 = vmatpush.bf16.msra.mxu0 %v319
    %329 = vmatmul.bf16.gmra.mxu0 %v316
    %v330 = vpop.f32.mrf.mxu0
    %v331 = vadd.f32 0.0, %v330
    %v332 = vpop.f32.mrf.mxu0
    %333 = vdwg.mxu0
    %334 = vst.msk [vmem:[#allocation2] sm:$0xff] %vm197, %v310
    %335 = vst.msk [vmem:[#allocation2 + $0x8] sm:$0xff] %vm197, %v331
    %v337 = vunpack.c.l.b16 %v188
    %v338 = vpack.c.b16 %v337, %v337
    %339 = vrot.lane.b32.xlu0 %v338, 120
    %v340 = vpop.permute.xlu0 %339
    %341 = vrot.lane.b32.xlu0 %v194, 88
    %v342 = vpop.permute.xlu0 %341
    %v344 = vsel %vm197, %v340, 0
    %v347 = vsel %vm197, %v342, 0
    %349 = vmatpush.bf16.xpose.msra.mxu0 0
    %350 = vmatpush.bf16.xpose.msra.mxu0 0
    %351 = vmatpush.bf16.xpose.msra.mxu0 0
    %352 = vmatpush.bf16.xpose.msra.mxu0 0
    %353 = vmatpush.bf16.xpose.msra.mxu0 0
    %354 = vmatpush.bf16.xpose.msra.mxu0 0
    %355 = vmatpush.bf16.xpose.msra.mxu0 0
    %356 = vmatpush.bf16.xpose.msra.mxu0 %v347
    %357 = vmatmul.bf16.gmra.mxu0 %v344
    %v358 = vpop.f32.mrf.mxu0
    %v359 = vadd.f32 %v55, %v358
    %v360 = vpop.f32.mrf.mxu0
    %361 = vdwg.mxu0
    %v363 = vunpack.c.l.b16 %v189
    %v364 = vpack.c.b16 %v363, %v363
    %365 = vrot.lane.b32.xlu0 %v364, 120
    %v366 = vpop.permute.xlu0 %365
    %367 = vrot.lane.b32.xlu0 %v219, 88
    %v368 = vpop.permute.xlu0 %367
    %v370 = vsel %vm197, %v366, 0
    %v373 = vsel %vm197, %v368, 0
    %375 = vmatpush.bf16.xpose.msra.mxu0 0
    %376 = vmatpush.bf16.xpose.msra.mxu0 0
    %377 = vmatpush.bf16.xpose.msra.mxu0 0
    %378 = vmatpush.bf16.xpose.msra.mxu0 0
    %379 = vmatpush.bf16.xpose.msra.mxu0 0
    %380 = vmatpush.bf16.xpose.msra.mxu0 0
    %381 = vmatpush.bf16.xpose.msra.mxu0 0
    %382 = vmatpush.bf16.xpose.msra.mxu0 %v373
    %383 = vmatmul.bf16.gmra.mxu0 %v370
    %v384 = vpop.f32.mrf.mxu0
    %v385 = vadd.f32 %v55, %v384
    %v386 = vpop.f32.mrf.mxu0
    %387 = vdwg.mxu0
    %v388 = vsel %vm197, %v359, -inf
    %389 = vmax.xlane.f32.xlu0 %v388
    %v390 = vpop.xlane.xlu0 %389
    %v391 = vsel %vm197, %v385, -inf
    %392 = vmax.xlane.f32.xlu0 %v391
    %v393 = vpop.xlane.xlu0 %392
    %v394 = vsub.f32 %v359, %v390
    %v395 = vsub.f32 %v385, %v393
    %v396 = vmul.f32 %v394, 1.442695
    %v397 = vpow.pop %v396
    %v398 = vmul.f32 %v395, 1.442695
    %v399 = vpow.pop %v398
    %v400 = vsel %vm197, %v397, 0.0
    %401 = vadd.xlane.f32.xlu0 %v400
    %v402 = vpop.xlane.xlu0 %401
    %v403 = vsel %vm197, %v399, 0.0
    %404 = vadd.xlane.f32.xlu0 %v403
    %v405 = vpop.xlane.xlu0 %404
    %v406 = vrcp.pop %v402
    %v407 = vmul.f32 %v402, %v406
    %v408 = vsub.f32 1.0, %v407
    %v409 = vmul.f32 %v406, %v408
    %v410 = vadd.f32 %v406, %v409
    %vm411 = vweird.f32 %v402
    %vm412 = vweird.f32 %v406
    %vm413 = vmor %vm411, %vm412
    %v414 = vsel %vm413, %v406, %v410
    %v415 = vand.u32 2147483647, %v402
    %vm416 = vcmp.eq.f32.partialorder %v415, 8.507059e+37
    %v417 = vand.u32 %v402, 2147483648
    %v418 = vor.u32 1.1754944e-38, %v417
    %v419 = vsel %vm416, %v418, %v414
    %v420 = vmul.f32 %v397, %v419
    %v421 = vrcp.pop %v405
    %v422 = vmul.f32 %v405, %v421
    %v423 = vsub.f32 1.0, %v422
    %v424 = vmul.f32 %v421, %v423
    %v425 = vadd.f32 %v421, %v424
    %vm426 = vweird.f32 %v405
    %vm427 = vweird.f32 %v421
    %vm428 = vmor %vm426, %vm427
    %v429 = vsel %vm428, %v421, %v425
    %v430 = vand.u32 2147483647, %v405
    %vm431 = vcmp.eq.f32.partialorder %v430, 8.507059e+37
    %v432 = vand.u32 %v405, 2147483648
    %v433 = vor.u32 1.1754944e-38, %v432
    %v434 = vsel %vm431, %v433, %v429
    %v435 = vmul.f32 %v399, %v434
    %v436 = vpack.c.bf16 %v420, %v420
    %v437 = vpack.c.bf16 %v435, %v435
    %438 = vrot.lane.b32.xlu0 %v194, 56
    %v439 = vpop.permute.xlu0 %438
    %v441 = vsel %vm197, %v436, 0
    %v444 = vsel %vm296, %v439, 0
    %446 = vmatpush.bf16.msra.mxu0 0
    %447 = vmatpush.bf16.msra.mxu0 0
    %448 = vmatpush.bf16.msra.mxu0 0
    %449 = vmatpush.bf16.msra.mxu0 0
    %450 = vmatpush.bf16.msra.mxu0 0
    %451 = vmatpush.bf16.msra.mxu0 0
    %452 = vmatpush.bf16.msra.mxu0 0
    %453 = vmatpush.bf16.msra.mxu0 %v444
    %454 = vmatmul.bf16.gmra.mxu0 %v441
    %v455 = vpop.f32.mrf.mxu0
    %v456 = vadd.f32 0.0, %v455
    %v457 = vpop.f32.mrf.mxu0
    %458 = vdwg.mxu0
    %459 = vrot.lane.b32.xlu0 %v219, 56
    %v460 = vpop.permute.xlu0 %459
    %v462 = vsel %vm197, %v437, 0
    %v465 = vsel %vm296, %v460, 0
    %467 = vmatpush.bf16.msra.mxu0 0
    %468 = vmatpush.bf16.msra.mxu0 0
    %469 = vmatpush.bf16.msra.mxu0 0
    %470 = vmatpush.bf16.msra.mxu0 0
    %471 = vmatpush.bf16.msra.mxu0 0
    %472 = vmatpush.bf16.msra.mxu0 0
    %473 = vmatpush.bf16.msra.mxu0 0
    %474 = vmatpush.bf16.msra.mxu0 %v465
    %475 = vmatmul.bf16.gmra.mxu0 %v462
    %v476 = vpop.f32.mrf.mxu0
    %v477 = vadd.f32 0.0, %v476
    %v478 = vpop.f32.mrf.mxu0
    %479 = vdwg.mxu0
    %482 = vrot.lane.b32.xlu0 %v456, 8
    %v483 = vpop.permute.xlu0 %482
    %484 = vrot.lane.b32.xlu0 %v477, 8
    %v485 = vpop.permute.xlu0 %484
    %vm488 = vcmask 130112
    %489 = vst.msk [vmem:[#allocation2] sm:$0xff] %vm488, %v483
    %490 = vst.msk [vmem:[#allocation2 + $0x8] sm:$0xff] %vm488, %v485
    %491 = vrot.lane.b32.xlu0 %v338, 112
    %v492 = vpop.permute.xlu0 %491
    %493 = vrot.lane.b32.xlu0 %v194, 80
    %v494 = vpop.permute.xlu0 %493
    %v496 = vsel %vm197, %v492, 0
    %v499 = vsel %vm197, %v494, 0
    %501 = vmatpush.bf16.xpose.msra.mxu0 0
    %502 = vmatpush.bf16.xpose.msra.mxu0 0
    %503 = vmatpush.bf16.xpose.msra.mxu0 0
    %504 = vmatpush.bf16.xpose.msra.mxu0 0
    %505 = vmatpush.bf16.xpose.msra.mxu0 0
    %506 = vmatpush.bf16.xpose.msra.mxu0 0
    %507 = vmatpush.bf16.xpose.msra.mxu0 0
    %508 = vmatpush.bf16.xpose.msra.mxu0 %v499
    %509 = vmatmul.bf16.gmra.mxu0 %v496
    %v510 = vpop.f32.mrf.mxu0
    %v511 = vadd.f32 %v55, %v510
    %v512 = vpop.f32.mrf.mxu0
    %513 = vdwg.mxu0
    %514 = vrot.lane.b32.xlu0 %v364, 112
    %v515 = vpop.permute.xlu0 %514
    %516 = vrot.lane.b32.xlu0 %v219, 80
    %v517 = vpop.permute.xlu0 %516
    %v519 = vsel %vm197, %v515, 0
    %v522 = vsel %vm197, %v517, 0
    %524 = vmatpush.bf16.xpose.msra.mxu0 0
    %525 = vmatpush.bf16.xpose.msra.mxu0 0
    %526 = vmatpush.bf16.xpose.msra.mxu0 0
    %527 = vmatpush.bf16.xpose.msra.mxu0 0
    %528 = vmatpush.bf16.xpose.msra.mxu0 0
    %529 = vmatpush.bf16.xpose.msra.mxu0 0
    %530 = vmatpush.bf16.xpose.msra.mxu0 0
    %531 = vmatpush.bf16.xpose.msra.mxu0 %v522
    %532 = vmatmul.bf16.gmra.mxu0 %v519
    %v533 = vpop.f32.mrf.mxu0
    %v534 = vadd.f32 %v55, %v533
    %v535 = vpop.f32.mrf.mxu0
    %536 = vdwg.mxu0
    %v537 = vsel %vm197, %v511, -inf
    %538 = vmax.xlane.f32.xlu0 %v537
    %v539 = vpop.xlane.xlu0 %538
    %v540 = vsel %vm197, %v534, -inf
    %541 = vmax.xlane.f32.xlu0 %v540
    %v542 = vpop.xlane.xlu0 %541
    %v543 = vsub.f32 %v511, %v539
    %v544 = vsub.f32 %v534, %v542
    %v545 = vmul.f32 %v543, 1.442695
    %v546 = vpow.pop %v545
    %v547 = vmul.f32 %v544, 1.442695
    %v548 = vpow.pop %v547
    %v549 = vsel %vm197, %v546, 0.0
    %550 = vadd.xlane.f32.xlu0 %v549
    %v551 = vpop.xlane.xlu0 %550
    %v552 = vsel %vm197, %v548, 0.0
    %553 = vadd.xlane.f32.xlu0 %v552
    %v554 = vpop.xlane.xlu0 %553
    %v555 = vrcp.pop %v551
    %v556 = vmul.f32 %v551, %v555
    %v557 = vsub.f32 1.0, %v556
    %v558 = vmul.f32 %v555, %v557
    %v559 = vadd.f32 %v555, %v558
    %vm560 = vweird.f32 %v551
    %vm561 = vweird.f32 %v555
    %vm562 = vmor %vm560, %vm561
    %v563 = vsel %vm562, %v555, %v559
    %v564 = vand.u32 2147483647, %v551
    %vm565 = vcmp.eq.f32.partialorder %v564, 8.507059e+37
    %v566 = vand.u32 %v551, 2147483648
    %v567 = vor.u32 1.1754944e-38, %v566
    %v568 = vsel %vm565, %v567, %v563
    %v569 = vmul.f32 %v546, %v568
    %v570 = vrcp.pop %v554
    %v571 = vmul.f32 %v554, %v570
    %v572 = vsub.f32 1.0, %v571
    %v573 = vmul.f32 %v570, %v572
    %v574 = vadd.f32 %v570, %v573
    %vm575 = vweird.f32 %v554
    %vm576 = vweird.f32 %v570
    %vm577 = vmor %vm575, %vm576
    %v578 = vsel %vm577, %v570, %v574
    %v579 = vand.u32 2147483647, %v554
    %vm580 = vcmp.eq.f32.partialorder %v579, 8.507059e+37
    %v581 = vand.u32 %v554, 2147483648
    %v582 = vor.u32 1.1754944e-38, %v581
    %v583 = vsel %vm580, %v582, %v578
    %v584 = vmul.f32 %v548, %v583
    %v585 = vpack.c.bf16 %v569, %v569
    %v586 = vpack.c.bf16 %v584, %v584
    %587 = vrot.lane.b32.xlu0 %v194, 48
    %v588 = vpop.permute.xlu0 %587
    %v590 = vsel %vm197, %v585, 0
    %v593 = vsel %vm296, %v588, 0
    %595 = vmatpush.bf16.msra.mxu0 0
    %596 = vmatpush.bf16.msra.mxu0 0
    %597 = vmatpush.bf16.msra.mxu0 0
    %598 = vmatpush.bf16.msra.mxu0 0
    %599 = vmatpush.bf16.msra.mxu0 0
    %600 = vmatpush.bf16.msra.mxu0 0
    %601 = vmatpush.bf16.msra.mxu0 0
    %602 = vmatpush.bf16.msra.mxu0 %v593
    %603 = vmatmul.bf16.gmra.mxu0 %v590
    %v604 = vpop.f32.mrf.mxu0
    %v605 = vadd.f32 0.0, %v604
    %v606 = vpop.f32.mrf.mxu0
    %607 = vdwg.mxu0
    %608 = vrot.lane.b32.xlu0 %v219, 48
    %v609 = vpop.permute.xlu0 %608
    %v611 = vsel %vm197, %v586, 0
    %v614 = vsel %vm296, %v609, 0
    %616 = vmatpush.bf16.msra.mxu0 0
    %617 = vmatpush.bf16.msra.mxu0 0
    %618 = vmatpush.bf16.msra.mxu0 0
    %619 = vmatpush.bf16.msra.mxu0 0
    %620 = vmatpush.bf16.msra.mxu0 0
    %621 = vmatpush.bf16.msra.mxu0 0
    %622 = vmatpush.bf16.msra.mxu0 0
    %623 = vmatpush.bf16.msra.mxu0 %v614
    %624 = vmatmul.bf16.gmra.mxu0 %v611
    %v625 = vpop.f32.mrf.mxu0
    %v626 = vadd.f32 0.0, %v625
    %v627 = vpop.f32.mrf.mxu0
    %628 = vdwg.mxu0
    %631 = vrot.lane.b32.xlu0 %v605, 16
    %v632 = vpop.permute.xlu0 %631
    %633 = vrot.lane.b32.xlu0 %v626, 16
    %v634 = vpop.permute.xlu0 %633
    %vm637 = vcmask 195712
    %638 = vst.msk [vmem:[#allocation2] sm:$0xff] %vm637, %v632
    %639 = vst.msk [vmem:[#allocation2 + $0x8] sm:$0xff] %vm637, %v634
    %640 = vrot.lane.b32.xlu0 %v338, 104
    %v641 = vpop.permute.xlu0 %640
    %642 = vrot.lane.b32.xlu0 %v194, 72
    %v643 = vpop.permute.xlu0 %642
    %v645 = vsel %vm197, %v641, 0
    %v648 = vsel %vm197, %v643, 0
    %650 = vmatpush.bf16.xpose.msra.mxu0 0
    %651 = vmatpush.bf16.xpose.msra.mxu0 0
    %652 = vmatpush.bf16.xpose.msra.mxu0 0
    %653 = vmatpush.bf16.xpose.msra.mxu0 0
    %654 = vmatpush.bf16.xpose.msra.mxu0 0
    %655 = vmatpush.bf16.xpose.msra.mxu0 0
    %656 = vmatpush.bf16.xpose.msra.mxu0 0
    %657 = vmatpush.bf16.xpose.msra.mxu0 %v648
    %658 = vmatmul.bf16.gmra.mxu0 %v645
    %v659 = vpop.f32.mrf.mxu0
    %v660 = vadd.f32 %v55, %v659
    %v661 = vpop.f32.mrf.mxu0
    %662 = vdwg.mxu0
    %663 = vrot.lane.b32.xlu0 %v364, 104
    %v664 = vpop.permute.xlu0 %663
    %665 = vrot.lane.b32.xlu0 %v219, 72
    %v666 = vpop.permute.xlu0 %665
    %v668 = vsel %vm197, %v664, 0
    %v671 = vsel %vm197, %v666, 0
    %673 = vmatpush.bf16.xpose.msra.mxu0 0
    %674 = vmatpush.bf16.xpose.msra.mxu0 0
    %675 = vmatpush.bf16.xpose.msra.mxu0 0
    %676 = vmatpush.bf16.xpose.msra.mxu0 0
    %677 = vmatpush.bf16.xpose.msra.mxu0 0
    %678 = vmatpush.bf16.xpose.msra.mxu0 0
    %679 = vmatpush.bf16.xpose.msra.mxu0 0
    %680 = vmatpush.bf16.xpose.msra.mxu0 %v671
    %681 = vmatmul.bf16.gmra.mxu0 %v668
    %v682 = vpop.f32.mrf.mxu0
    %v683 = vadd.f32 %v55, %v682
    %v684 = vpop.f32.mrf.mxu0
    %685 = vdwg.mxu0
    %v686 = vsel %vm197, %v660, -inf
    %687 = vmax.xlane.f32.xlu0 %v686
    %v688 = vpop.xlane.xlu0 %687
    %v689 = vsel %vm197, %v683, -inf
    %690 = vmax.xlane.f32.xlu0 %v689
    %v691 = vpop.xlane.xlu0 %690
    %v692 = vsub.f32 %v660, %v688
    %v693 = vsub.f32 %v683, %v691
    %v694 = vmul.f32 %v692, 1.442695
    %v695 = vpow.pop %v694
    %v696 = vmul.f32 %v693, 1.442695
    %v697 = vpow.pop %v696
    %v698 = vsel %vm197, %v695, 0.0
    %699 = vadd.xlane.f32.xlu0 %v698
    %v700 = vpop.xlane.xlu0 %699
    %v701 = vsel %vm197, %v697, 0.0
    %702 = vadd.xlane.f32.xlu0 %v701
    %v703 = vpop.xlane.xlu0 %702
    %v704 = vrcp.pop %v700
    %v705 = vmul.f32 %v700, %v704
    %v706 = vsub.f32 1.0, %v705
    %v707 = vmul.f32 %v704, %v706
    %v708 = vadd.f32 %v704, %v707
    %vm709 = vweird.f32 %v700
    %vm710 = vweird.f32 %v704
    %vm711 = vmor %vm709, %vm710
    %v712 = vsel %vm711, %v704, %v708
    %v713 = vand.u32 2147483647, %v700
    %vm714 = vcmp.eq.f32.partialorder %v713, 8.507059e+37
    %v715 = vand.u32 %v700, 2147483648
    %v716 = vor.u32 1.1754944e-38, %v715
    %v717 = vsel %vm714, %v716, %v712
    %v718 = vmul.f32 %v695, %v717
    %v719 = vrcp.pop %v703
    %v720 = vmul.f32 %v703, %v719
    %v721 = vsub.f32 1.0, %v720
    %v722 = vmul.f32 %v719, %v721
    %v723 = vadd.f32 %v719, %v722
    %vm724 = vweird.f32 %v703
    %vm725 = vweird.f32 %v719
    %vm726 = vmor %vm724, %vm725
    %v727 = vsel %vm726, %v719, %v723
    %v728 = vand.u32 2147483647, %v703
    %vm729 = vcmp.eq.f32.partialorder %v728, 8.507059e+37
    %v730 = vand.u32 %v703, 2147483648
    %v731 = vor.u32 1.1754944e-38, %v730
    %v732 = vsel %vm729, %v731, %v727
    %v733 = vmul.f32 %v697, %v732
    %v734 = vpack.c.bf16 %v718, %v718
    %v735 = vpack.c.bf16 %v733, %v733
    %736 = vrot.lane.b32.xlu0 %v194, 40
    %v737 = vpop.permute.xlu0 %736
    %v739 = vsel %vm197, %v734, 0
    %v742 = vsel %vm296, %v737, 0
    %744 = vmatpush.bf16.msra.mxu0 0
    %745 = vmatpush.bf16.msra.mxu0 0
    %746 = vmatpush.bf16.msra.mxu0 0
    %747 = vmatpush.bf16.msra.mxu0 0
    %748 = vmatpush.bf16.msra.mxu0 0
    %749 = vmatpush.bf16.msra.mxu0 0
    %750 = vmatpush.bf16.msra.mxu0 0
    %751 = vmatpush.bf16.msra.mxu0 %v742
    %752 = vmatmul.bf16.gmra.mxu0 %v739
    %v753 = vpop.f32.mrf.mxu0
    %v754 = vadd.f32 0.0, %v753
    %v755 = vpop.f32.mrf.mxu0
    %756 = vdwg.mxu0
    %757 = vrot.lane.b32.xlu0 %v219, 40
    %v758 = vpop.permute.xlu0 %757
    %v760 = vsel %vm197, %v735, 0
    %v763 = vsel %vm296, %v758, 0
    %765 = vmatpush.bf16.msra.mxu0 0
    %766 = vmatpush.bf16.msra.mxu0 0
    %767 = vmatpush.bf16.msra.mxu0 0
    %768 = vmatpush.bf16.msra.mxu0 0
    %769 = vmatpush.bf16.msra.mxu0 0
    %770 = vmatpush.bf16.msra.mxu0 0
    %771 = vmatpush.bf16.msra.mxu0 0
    %772 = vmatpush.bf16.msra.mxu0 %v763
    %773 = vmatmul.bf16.gmra.mxu0 %v760
    %v774 = vpop.f32.mrf.mxu0
    %v775 = vadd.f32 0.0, %v774
    %v776 = vpop.f32.mrf.mxu0
    %777 = vdwg.mxu0
    %780 = vrot.lane.b32.xlu0 %v754, 24
    %v781 = vpop.permute.xlu0 %780
    %782 = vrot.lane.b32.xlu0 %v775, 24
    %v783 = vpop.permute.xlu0 %782
    %vm786 = vcmask 261312
    %787 = vst.msk [vmem:[#allocation2] sm:$0xff] %vm786, %v781
    %788 = vst.msk [vmem:[#allocation2 + $0x8] sm:$0xff] %vm786, %v783
    %v789 = vld [vmem:[#allocation2] sm:$0xff]
    %v790 = vld [vmem:[#allocation2 + $0x8] sm:$0xff]
    %v791 = vpack.c.bf16 %v790, %v789
    %v792 = vld [vmem:[%s6] sm:$0xf]
    %v793 = vld [vmem:[%s6 + $0x4] sm:$0xf]
    %v794 = vld [vmem:[%s6 + $0x8] sm:$0xf]
    %v795 = vld [vmem:[%s6 + $0xc] sm:$0xf]
    %v797 = vperm.slane %v47, 0
    %v803 = vunpack.c.l.b16 %v792
    %v804 = vunpack.c.l.b16 %v793
    %v805 = vunpack.c.l.b16 %v794
    %v806 = vunpack.c.l.b16 %v795
    %v807 = vpack.c.b16 %v804, %v803
    %v808 = vpack.c.b16 %v806, %v805
    %v812 = vsel %vm58, %v791, 0
    %814 = vmatpush.bf16.msra.mxu0 0
    %815 = vmatpush.bf16.msra.mxu0 0
    %816 = vmatpush.bf16.msra.mxu0 0
    %817 = vmatpush.bf16.msra.mxu0 0
    %818 = vmatpush.bf16.msra.mxu0 0
    %819 = vmatpush.bf16.msra.mxu0 0
    %820 = vmatpush.bf16.msra.mxu0 %v808
    %821 = vmatpush.bf16.msra.mxu0 %v807
    %822 = vmatmul.bf16.gmra.mxu0 %v812
    %v823 = vpop.f32.mrf.mxu0
    %v824 = vadd.f32 %v797, %v823
    %v825 = vpop.f32.mrf.mxu0
    %v826 = vadd.f32 %v797, %v825
    %827 = vdwg.mxu0
    %v828 = vadd.f32 %v824, %v56
    %v829 = vadd.f32 %v826, %v57
    %v830 = vsel %vm58, %v828, 0.0
    %831 = vadd.xlane.f32.xlu0 %v830
    %v832 = vpop.xlane.xlu0 %831
    %v833 = vsel %vm58, %v829, 0.0
    %834 = vadd.xlane.f32.xlu0 %v833
    %v835 = vpop.xlane.xlu0 %834
    %v836 = vmul.f32 %v832, %v71
    %v837 = vmul.f32 %v835, %v71
    %v838 = vsub.f32 %v828, %v836
    %v839 = vsub.f32 %v829, %v837
    %v840 = vmul.f32 %v838, %v838
    %v841 = vmul.f32 %v839, %v839
    %v842 = vsel %vm58, %v840, 0.0
    %843 = vadd.xlane.f32.xlu0 %v842
    %v844 = vpop.xlane.xlu0 %843
    %v845 = vsel %vm58, %v841, 0.0
    %846 = vadd.xlane.f32.xlu0 %v845
    %v847 = vpop.xlane.xlu0 %846
    %v848 = vmul.f32 %v844, 0.032258064
    %v849 = vmul.f32 %v847, 0.032258064
    %v850 = vadd.f32 %v848, 1e-05
    %v851 = vadd.f32 %v849, 1e-05
    %v852 = vrsqrt.pop %v850
    %v853 = vmul.f32 %v852, %v850
    %v854 = vmul.f32 %v853, %v852
    %v855 = vmul.f32 0.5, %v854
    %v856 = vsub.f32 1.5, %v855
    %v857 = vmul.f32 %v852, %v856
    %v858 = vmul.f32 %v850, %v857
    %vm859 = vcmp.eq.f32.partialorder %v850, inf
    %v860 = vsel %vm859, %v850, %v858
    %vm861 = vcmp.eq.f32.partialorder %v850, 0.0
    %v862 = vand.u32 %v850, 2147483648
    %v863 = vsel %vm861, %v862, %v860
    %v864 = vrsqrt.pop %v851
    %v865 = vmul.f32 %v864, %v851
    %v866 = vmul.f32 %v865, %v864
    %v867 = vmul.f32 0.5, %v866
    %v868 = vsub.f32 1.5, %v867
    %v869 = vmul.f32 %v864, %v868
    %v870 = vmul.f32 %v851, %v869
    %vm871 = vcmp.eq.f32.partialorder %v851, inf
    %v872 = vsel %vm871, %v851, %v870
    %vm873 = vcmp.eq.f32.partialorder %v851, 0.0
    %v874 = vand.u32 %v851, 2147483648
    %v875 = vsel %vm873, %v874, %v872
    %v876 = vrcp.pop %v863
    %v877 = vmul.f32 %v863, %v876
    %v878 = vsub.f32 1.0, %v877
    %v879 = vmul.f32 %v876, %v878
    %v880 = vadd.f32 %v876, %v879
    %vm881 = vweird.f32 %v863
    %vm882 = vweird.f32 %v876
    %vm883 = vmor %vm881, %vm882
    %v884 = vsel %vm883, %v876, %v880
    %v885 = vand.u32 2147483647, %v863
    %vm886 = vcmp.eq.f32.partialorder %v885, 8.507059e+37
    %v887 = vand.u32 %v863, 2147483648
    %v888 = vor.u32 1.1754944e-38, %v887
    %v889 = vsel %vm886, %v888, %v884
    %v890 = vmul.f32 %v838, %v889
    %v891 = vrcp.pop %v875
    %v892 = vmul.f32 %v875, %v891
    %v893 = vsub.f32 1.0, %v892
    %v894 = vmul.f32 %v891, %v893
    %v895 = vadd.f32 %v891, %v894
    %vm896 = vweird.f32 %v875
    %vm897 = vweird.f32 %v891
    %vm898 = vmor %vm896, %vm897
    %v899 = vsel %vm898, %v891, %v895
    %v900 = vand.u32 2147483647, %v875
    %vm901 = vcmp.eq.f32.partialorder %v900, 8.507059e+37
    %v902 = vand.u32 %v875, 2147483648
    %v903 = vor.u32 1.1754944e-38, %v902
    %v904 = vsel %vm901, %v903, %v899
    %v905 = vmul.f32 %v839, %v904
    %v907 = vperm.slane %v45, 0
    %v909 = vmul.f32 %v907, %v890
    %v910 = vmul.f32 %v907, %v905
    %v912 = vperm.slane %v46, 0
    %v914 = vadd.f32 %v909, %v912
    %v915 = vadd.f32 %v910, %v912
    %v916 = vpack.c.bf16 %v915, %v914
    %v917 = vld [vmem:[%s8] sm:$0xf]
    %v918 = vld [vmem:[%s8 + $0x4] sm:$0xf]
    %v919 = vld [vmem:[%s8 + $0x8] sm:$0xf]
    %v920 = vld [vmem:[%s8 + $0xc] sm:$0xf]
    %v922 = vperm.slane %v48, 0
    %v928 = vunpack.c.l.b16 %v917
    %v929 = vunpack.c.l.b16 %v918
    %v930 = vunpack.c.l.b16 %v919
    %v931 = vunpack.c.l.b16 %v920
    %v932 = vpack.c.b16 %v929, %v928
    %v933 = vpack.c.b16 %v931, %v930
    %v937 = vsel %vm58, %v916, 0
    %939 = vmatpush.bf16.msra.mxu0 0
    %940 = vmatpush.bf16.msra.mxu0 0
    %941 = vmatpush.bf16.msra.mxu0 0
    %942 = vmatpush.bf16.msra.mxu0 0
    %943 = vmatpush.bf16.msra.mxu0 0
    %944 = vmatpush.bf16.msra.mxu0 0
    %945 = vmatpush.bf16.msra.mxu0 %v933
    %946 = vmatpush.bf16.msra.mxu0 %v932
    %947 = vmatmul.bf16.gmra.mxu0 %v937
    %v948 = vpop.f32.mrf.mxu0
    %v949 = vadd.f32 %v922, %v948
    %v950 = vpop.f32.mrf.mxu0
    %v951 = vadd.f32 %v922, %v950
    %952 = vdwg.mxu0
    %v953 = vmul.f32 %v949, 0.5
    %v954 = vmul.f32 %v951, 0.5
    %v955 = vmul.f32 %v949, 0.044715
    %v956 = vmul.f32 %v951, 0.044715
    %v957 = vmul.f32 %v955, %v949
    %v958 = vmul.f32 %v956, %v951
    %v959 = vmul.f32 %v957, %v949
    %v960 = vmul.f32 %v958, %v951
    %v961 = vadd.f32 %v949, %v959
    %v962 = vadd.f32 %v951, %v960
    %v963 = vmul.f32 %v961, 0.7978845
    %v964 = vmul.f32 %v962, 0.7978845
    %v965 = vtanh.pop %v963
    %v966 = vtanh.pop %v964
    %v967 = vadd.f32 %v965, 1.0
    %v968 = vadd.f32 %v966, 1.0
    %v969 = vmul.f32 %v953, %v967
    %v970 = vmul.f32 %v954, %v968
    %v971 = vpack.c.bf16 %v970, %v969
    %v972 = vld [vmem:[%s10] sm:$0xf]
    %v973 = vld [vmem:[%s10 + $0x4] sm:$0xf]
    %v974 = vld [vmem:[%s10 + $0x8] sm:$0xf]
    %v975 = vld [vmem:[%s10 + $0xc] sm:$0xf]
    %v976 = vld [vmem:[%s10 + $0x10] sm:$0xf]
    %v977 = vld [vmem:[%s10 + $0x14] sm:$0xf]
    %v978 = vld [vmem:[%s10 + $0x18] sm:$0xf]
    %v979 = vld [vmem:[%s10 + $0x1c] sm:$0xf]
    %v980 = vld [vmem:[%s10 + $0x20] sm:$0xf]
    %v981 = vld [vmem:[%s10 + $0x24] sm:$0xf]
    %v982 = vld [vmem:[%s10 + $0x28] sm:$0xf]
    %v983 = vld [vmem:[%s10 + $0x2c] sm:$0xf]
    %v984 = vld [vmem:[%s10 + $0x30] sm:$0xf]
    %v985 = vld [vmem:[%s10 + $0x34] sm:$0xf]
    %v986 = vld [vmem:[%s10 + $0x38] sm:$0xf]
    %v987 = vld [vmem:[%s10 + $0x3c] sm:$0xf]
    %v989 = vperm.slane %v49, 0
    %v1007 = vunpack.c.l.b16 %v972
    %v1008 = vunpack.c.l.b16 %v973
    %v1009 = vunpack.c.l.b16 %v974
    %v1010 = vunpack.c.l.b16 %v975
    %v1011 = vunpack.c.l.b16 %v976
    %v1012 = vunpack.c.l.b16 %v977
    %v1013 = vunpack.c.l.b16 %v978
    %v1014 = vunpack.c.l.b16 %v979
    %v1015 = vunpack.c.l.b16 %v980
    %v1016 = vunpack.c.l.b16 %v981
    %v1017 = vunpack.c.l.b16 %v982
    %v1018 = vunpack.c.l.b16 %v983
    %v1019 = vunpack.c.l.b16 %v984
    %v1020 = vunpack.c.l.b16 %v985
    %v1021 = vunpack.c.l.b16 %v986
    %v1022 = vunpack.c.l.b16 %v987
    %v1023 = vpack.c.b16 %v1008, %v1007
    %v1024 = vpack.c.b16 %v1010, %v1009
    %v1025 = vpack.c.b16 %v1012, %v1011
    %v1026 = vpack.c.b16 %v1014, %v1013
    %v1027 = vpack.c.b16 %v1016, %v1015
    %v1028 = vpack.c.b16 %v1018, %v1017
    %v1029 = vpack.c.b16 %v1020, %v1019
    %v1030 = vpack.c.b16 %v1022, %v1021
    %1039 = vmatpush.bf16.msra.mxu0 %v1030
    %1040 = vmatpush.bf16.msra.mxu0 %v1029
    %1041 = vmatpush.bf16.msra.mxu0 %v1028
    %1042 = vmatpush.bf16.msra.mxu0 %v1027
    %1043 = vmatpush.bf16.msra.mxu0 %v1026
    %1044 = vmatpush.bf16.msra.mxu0 %v1025
    %1045 = vmatpush.bf16.msra.mxu0 %v1024
    %1046 = vmatpush.bf16.msra.mxu0 %v1023
    %1047 = vmatmul.bf16.gmra.mxu0 %v971
    %v1048 = vpop.f32.mrf.mxu0
    %v1049 = vadd.f32 %v989, %v1048
    %v1050 = vpop.f32.mrf.mxu0
    %v1051 = vadd.f32 %v989, %v1050
    %1052 = vdwg.mxu0
    %v1053 = vadd.f32 %v1049, %v828
    %v1054 = vadd.f32 %v1051, %v829
    %1055 = vst.msk [vmem:[#allocation3] sm:$0xff] %vm58, %v1053
    %1056 = vst.msk [vmem:[#allocation3 + $0x8] sm:$0xff] %vm58, %v1054
    // Predicated region
    $region50: #{tpu_custom_call.1} parent=1 // pred_check
      _
    $region51: #{tpu_custom_call.1} parent=1 // pred_check_branch
      %1058 = sbr.rel (0) target = $region53
    $region52: #{tpu_custom_call.1} parent=1 // pred_region
      %1060 = vsyncadd [#allocation4], 0
      %s1061 = sshll.u32 [#allocation3], 4
      %s1062 = int_to_ptr.vmem [resolvable:$true] %s1061
      %s1063 = sshll.u32 %s12, 4
      %s1064 = int_to_ptr.hbm [resolvable:$true] %s1063
      %1069 = dma.vmem_to_hbm [thread:$0]  %s1062, 256, %s1064, [#allocation4], 128, 128, 8
    $region53: #{tpu_custom_call.1} parent=1 // pred_fallthru
      _
    // Predicated region
    $region54: #{tpu_custom_call.1} parent=1 // pred_check
      _
    $region55: #{tpu_custom_call.1} parent=1 // pred_check_branch
      %1071 = sbr.rel (0) target = $region57
    $region56: #{tpu_custom_call.1} parent=1 // pred_region
      %1073 = dma.done [#allocation4], 256
    $region57: #{tpu_custom_call.1} parent=1 // pred_fallthru
      _
    %1074 = vsyncpa [#allocation4], 1

</llo_original>
